<compile_context>
chip_gen: v6e
topology: v6e:2x2x1
jax: 0.10.0
libtpu: 0.0.40
codegen_flags: <defaults>
</compile_context>

<pallas_src>
import numpy as np
import jax
import jax.numpy as jnp
from jax import lax
from jax.experimental import pallas as pl
from jax.experimental.pallas import tpu as pltpu


# ---------------------------------------------------------------------------
# Static layout of the two packed constant slabs (all blocks start at col 0,
# odd selector halves at lane 128 inside their block).
# ---------------------------------------------------------------------------
# slab "wc" (conv / pool / bias constants), width 208
_R_A1 = 0        # (84, 156)   conv1 banded weights  (3 bands x 28 rows)
_R_B2 = 88       # (312, 160)  conv2 banded weights  (4 bands x 78 rows)
_R_S1 = 400      # (32, 26)    pool1 row selector    (even rows 0:13, odd rows 16:29)
_R_S2 = 432      # (16, 10)    pool2 row selector    (even rows 0:5,  odd rows 8:13)
_R_C1 = 448      # (156, 206)  pool1 col selector    (even cols 0:78, odd cols 128:206)
_R_C2 = 608      # (160, 208)  pool2 col selector    (even cols 0:80, odd cols 128:208)
_R_BIAS = 768    # rows 768..772: b1(156), b2(160), fb1(120), fb2(84), fb3(10)
_WC_SHAPE = (776, 208)

# slab "wf" (fully-connected weights), width 120
_R_WF1 = 0       # (400, 120)
_R_WF2 = 400     # (120, 84)
_R_WF3 = 520     # (84, 10)
_WF_SHAPE = (608, 120)


# ---------------------------------------------------------------------------
# Fused kernel: conv1 -> relu -> pool -> conv2 -> relu -> pool -> fc1/2/3
# ---------------------------------------------------------------------------
def net_kernel(x_ref, wc_ref, wf_ref, out_ref, scr_ref):
    def mm(a, b):
        return jnp.dot(a, b, preferred_element_type=jnp.float32)

    # ---- conv1 (1->6, 3x3, valid): banded LHS (26,84) built in scratch, 1 matmul ----
    scr_ref[0:26, 0:28] = x_ref[0:26, :]
    scr_ref[0:26, 28:56] = x_ref[1:27, :]
    scr_ref[0:26, 56:84] = x_ref[2:28, :]
    y1 = mm(scr_ref[0:26, 0:84], wc_ref[_R_A1:_R_A1 + 84, 0:156])
    y1 = jnp.maximum(y1 + wc_ref[_R_BIAS:_R_BIAS + 1, 0:156], 0.0)        # (26,156)

    # ---- pool1: 2x2/stride-2 max over all 6 channels, stacked selectors ----
    t1 = mm(wc_ref[_R_S1:_R_S1 + 32, 0:26], y1)                           # (32,156)
    r1 = jnp.maximum(t1[0:13, :], t1[16:29, :])                           # (13,156)
    u1 = mm(r1, wc_ref[_R_C1:_R_C1 + 156, 0:206])                         # (13,206)
    p1 = jnp.maximum(u1[:, 0:78], u1[:, 128:206])                         # (13,78)

    # ---- conv2 (6->16, 4x4, valid): banded LHS (10,312) built in scratch, 1 matmul ----
    for kh in range(4):
        scr_ref[0:10, 128 + kh * 78:128 + (kh + 1) * 78] = p1[kh:kh + 10, :]
    y2 = mm(scr_ref[0:10, 128:440], wc_ref[_R_B2:_R_B2 + 312, 0:160])
    y2 = jnp.maximum(y2 + wc_ref[_R_BIAS + 1:_R_BIAS + 2, 0:160], 0.0)    # (10,160)

    # ---- pool2: stacked selectors ----
    t2 = mm(wc_ref[_R_S2:_R_S2 + 16, 0:10], y2)                           # (16,160)
    r2 = jnp.maximum(t2[0:5, :], t2[8:13, :])                             # (5,160)
    u2 = mm(r2, wc_ref[_R_C2:_R_C2 + 160, 0:208])                         # (5,208)
    p2 = jnp.maximum(u2[:, 0:80], u2[:, 128:208])                         # (5,80)

    # ---- flatten (torch (c,h,w) order baked into wf1) -> (1,400), then fc1/fc2/fc3 ----
    for h in range(5):
        scr_ref[26:27, h * 80:(h + 1) * 80] = p2[h:h + 1, :]
    h1 = mm(scr_ref[26:27, 0:400], wf_ref[_R_WF1:_R_WF1 + 400, 0:120])
    h1 = jnp.maximum(h1 + wc_ref[_R_BIAS + 2:_R_BIAS + 3, 0:120], 0.0)    # (1,120)
    h2 = mm(h1, wf_ref[_R_WF2:_R_WF2 + 120, 0:84])
    h2 = jnp.maximum(h2 + wc_ref[_R_BIAS + 3:_R_BIAS + 4, 0:84], 0.0)     # (1,84)
    out_ref[...] = (mm(h2, wf_ref[_R_WF3:_R_WF3 + 84, 0:10])
                    + wc_ref[_R_BIAS + 4:_R_BIAS + 5, 0:10])              # (1,10)


# ---------------------------------------------------------------------------
# Host-side, one-time weight layout preparation (pure data rearrangement)
# ---------------------------------------------------------------------------
def prepare_params(params):
    w1, b1, w2, b2, fw1, fb1, fw2, fb2, fw3, fb3 = [
        np.asarray(p, np.float32) for p in params]

    # conv1 banded weights: A1f[kh*28 + (w+kw), c*26 + w] = w1[c,0,kh,kw]
    A1 = np.zeros((3, 28, 156), np.float32)
    for kh in range(3):
        for c in range(6):
            for kw in range(3):
                for w in range(26):
                    A1[kh, w + kw, c * 26 + w] = w1[c, 0, kh, kw]
    A1f = A1.reshape(84, 156)

    # conv2 banded weights: B2f[kh*78 + ic*13 + (w+kw), oc*10 + w] = w2[oc,ic,kh,kw]
    B2 = np.zeros((4, 78, 160), np.float32)
    for kh in range(4):
        for oc in range(16):
            for ic in range(6):
                for kw in range(4):
                    for w in range(10):
                        B2[kh, ic * 13 + w + kw, oc * 10 + w] = w2[oc, ic, kh, kw]
    B2f = B2.reshape(312, 160)

    # 0/1 pooling selectors (exact in f32), stacked even/odd.
    def row_sel(n_out, n_in, off):
        return (np.arange(n_in)[None, :] ==
                2 * np.arange(n_out)[:, None] + off).astype(np.float32)

    def col_sel(n_in, n_out, off):
        return (np.arange(n_in)[:, None] ==
                2 * np.arange(n_out)[None, :] + off).astype(np.float32)

    S1 = np.zeros((32, 26), np.float32)
    S1[0:13] = row_sel(13, 26, 0)
    S1[16:29] = row_sel(13, 26, 1)
    S2 = np.zeros((16, 10), np.float32)
    S2[0:5] = row_sel(5, 10, 0)
    S2[8:13] = row_sel(5, 10, 1)
    C1 = np.zeros((156, 206), np.float32)
    C1[:, 0:78] = col_sel(156, 78, 0)
    C1[:, 128:206] = col_sel(156, 78, 1)
    C2 = np.zeros((160, 208), np.float32)
    C2[:, 0:80] = col_sel(160, 80, 0)
    C2[:, 128:208] = col_sel(160, 80, 1)

    # ---- pack slab 1: conv / pool / bias constants ----
    wc = np.zeros(_WC_SHAPE, np.float32)
    wc[_R_A1:_R_A1 + 84, 0:156] = A1f
    wc[_R_B2:_R_B2 + 312, 0:160] = B2f
    wc[_R_S1:_R_S1 + 32, 0:26] = S1
    wc[_R_S2:_R_S2 + 16, 0:10] = S2
    wc[_R_C1:_R_C1 + 156, 0:206] = C1
    wc[_R_C2:_R_C2 + 160, 0:208] = C2
    wc[_R_BIAS + 0, 0:156] = np.repeat(b1, 26)
    wc[_R_BIAS + 1, 0:160] = np.repeat(b2, 10)
    wc[_R_BIAS + 2, 0:120] = fb1
    wc[_R_BIAS + 3, 0:84] = fb2
    wc[_R_BIAS + 4, 0:10] = fb3

    # ---- pack slab 2: fc weights ----
    # fc1: wf1[h*80 + c*5 + w, j] = fw1[j, c*25 + h*5 + w]  (matches in-kernel flatten)
    wf1 = fw1.reshape(120, 16, 5, 5).transpose(2, 1, 3, 0).reshape(400, 120)
    wf = np.zeros(_WF_SHAPE, np.float32)
    wf[_R_WF1:_R_WF1 + 400, 0:120] = wf1
    wf[_R_WF2:_R_WF2 + 120, 0:84] = np.ascontiguousarray(fw2.T)
    wf[_R_WF3:_R_WF3 + 84, 0:10] = np.ascontiguousarray(fw3.T)

    return jnp.asarray(wc), jnp.asarray(wf)


# ---------------------------------------------------------------------------
# Wrapper (single gridless pallas_call, everything VMEM-resident)
# ---------------------------------------------------------------------------
_VMEM = pl.BlockSpec(memory_space=pltpu.MemorySpace.VMEM)


def net_forward(x, kparams):
    wc, wf = kparams
    out = pl.pallas_call(
        net_kernel,
        out_shape=jax.ShapeDtypeStruct((1, 10), jnp.float32),
        in_specs=[_VMEM, _VMEM, _VMEM],
        out_specs=_VMEM,
        scratch_shapes=[pltpu.VMEM((32, 512), jnp.float32)],
    )(x.reshape(28, 28), wc, wf)
    return out.reshape(10)


# ---------------------------------------------------------------------------
# Pure-JAX reference (high precision) and deterministic init
# ---------------------------------------------------------------------------
def net_forward_ref(x, params):
    w1, b1, w2, b2, fw1, fb1, fw2, fb2, fw3, fb3 = params
    dn = ('NCHW', 'OIHW', 'NCHW')
    hp = lax.Precision.HIGHEST
    y = lax.conv_general_dilated(x, w1, (1, 1), 'VALID', dimension_numbers=dn,
                                 precision=hp)
    y = jnp.maximum(y + b1[None, :, None, None], 0.0)
    y = lax.reduce_window(y, -jnp.inf, lax.max, (1, 1, 2, 2), (1, 1, 2, 2), 'VALID')
    y = lax.conv_general_dilated(y, w2, (1, 1), 'VALID', dimension_numbers=dn,
                                 precision=hp)
    y = jnp.maximum(y + b2[None, :, None, None], 0.0)
    y = lax.reduce_window(y, -jnp.inf, lax.max, (1, 1, 2, 2), (1, 1, 2, 2), 'VALID')
    v = y.reshape(-1)
    h = jnp.maximum(jnp.dot(fw1, v, precision=hp) + fb1, 0.0)
    h = jnp.maximum(jnp.dot(fw2, h, precision=hp) + fb2, 0.0)
    return jnp.dot(fw3, h, precision=hp) + fb3


def init_params(key):
    ks = jax.random.split(key, 10)

    def uni(k, shape, fan_in):
        bound = float(fan_in) ** -0.5
        return jax.random.uniform(k, shape, jnp.float32, -bound, bound)

    w1 = uni(ks[0], (6, 1, 3, 3), 1 * 3 * 3)
    b1 = uni(ks[1], (6,), 1 * 3 * 3)
    w2 = uni(ks[2], (16, 6, 4, 4), 6 * 4 * 4)
    b2 = uni(ks[3], (16,), 6 * 4 * 4)
    fw1 = uni(ks[4], (120, 400), 400)
    fb1 = uni(ks[5], (120,), 400)
    fw2 = uni(ks[6], (84, 120), 120)
    fb2 = uni(ks[7], (84,), 120)
    fw3 = uni(ks[8], (10, 84), 84)
    fb3 = uni(ks[9], (10,), 84)
    return (w1, b1, w2, b2, fw1, fb1, fw2, fb2, fw3, fb3)


if __name__ == "__main__":
    key = jax.random.PRNGKey(0)
    pkey, xkey = jax.random.split(key)
    params = init_params(pkey)
    kparams = prepare_params(params)          # one-time weight layout prep
    x = jax.random.normal(xkey, (1, 1, 28, 28), jnp.float32)

    fwd = jax.jit(net_forward)
    out = fwd(x, kparams)
    out = jax.block_until_ready(out)
    assert out.shape == (10,) and out.dtype == jnp.float32

    ref = jax.block_until_ready(jax.jit(net_forward_ref)(x, params))
    assert jnp.allclose(out, ref, rtol=1e-3, atol=1e-3), \
        f"max abs diff {float(jnp.max(jnp.abs(out - ref)))}"

    print("KERNEL_OK")
</pallas_src>

<mosaic_0001>
module attributes {stable_mosaic.version = 11 : i64} {
  func.func @net_kernel(%arg0: memref<28x28xf32, #tpu.memory_space<vmem>>, %arg1: memref<776x208xf32, #tpu.memory_space<vmem>>, %arg2: memref<608x120xf32, #tpu.memory_space<vmem>>, %arg3: memref<1x10xf32, #tpu.memory_space<vmem>>, %arg4: memref<32x512xf32, #tpu.memory_space<vmem>>) attributes {dimension_semantics = [], scalar_prefetch = 0 : i64, scratch_operands = 1 : i64, tpu.core_type = #tpu.core_type<tc>} {
    %c0 = arith.constant 0 : index
    %c0_0 = arith.constant 0 : index
    %0 = vector.load %arg0[%c0, %c0_0] : memref<28x28xf32, #tpu.memory_space<vmem>>, vector<26x28xf32>
    %c0_1 = arith.constant 0 : index
    %c0_2 = arith.constant 0 : index
    %1 = vector.load %arg4[%c0_1, %c0_2] : memref<32x512xf32, #tpu.memory_space<vmem>>, vector<26x28xf32>
    tpu.vector_store %arg4[%c0_1, %c0_2], %0 {strides = array<i32>} : memref<32x512xf32, #tpu.memory_space<vmem>>, vector<26x28xf32>,
    %c1 = arith.constant 1 : index
    %c0_3 = arith.constant 0 : index
    %2 = vector.load %arg0[%c1, %c0_3] : memref<28x28xf32, #tpu.memory_space<vmem>>, vector<26x28xf32>
    %c0_4 = arith.constant 0 : index
    %c28 = arith.constant 28 : index
    %3 = vector.load %arg4[%c0_4, %c28] : memref<32x512xf32, #tpu.memory_space<vmem>>, vector<26x28xf32>
    tpu.vector_store %arg4[%c0_4, %c28], %2 {strides = array<i32>} : memref<32x512xf32, #tpu.memory_space<vmem>>, vector<26x28xf32>,
    %c2 = arith.constant 2 : index
    %c0_5 = arith.constant 0 : index
    %4 = vector.load %arg0[%c2, %c0_5] : memref<28x28xf32, #tpu.memory_space<vmem>>, vector<26x28xf32>
    %c0_6 = arith.constant 0 : index
    %c56 = arith.constant 56 : index
    %5 = vector.load %arg4[%c0_6, %c56] : memref<32x512xf32, #tpu.memory_space<vmem>>, vector<26x28xf32>
    tpu.vector_store %arg4[%c0_6, %c56], %4 {strides = array<i32>} : memref<32x512xf32, #tpu.memory_space<vmem>>, vector<26x28xf32>,
    %c0_7 = arith.constant 0 : index
    %c0_8 = arith.constant 0 : index
    %6 = vector.load %arg4[%c0_7, %c0_8] : memref<32x512xf32, #tpu.memory_space<vmem>>, vector<26x84xf32>
    %c0_9 = arith.constant 0 : index
    %c0_10 = arith.constant 0 : index
    %7 = vector.load %arg1[%c0_9, %c0_10] : memref<776x208xf32, #tpu.memory_space<vmem>>, vector<84x156xf32>
    %cst = arith.constant dense<0.000000e+00> : vector<26x156xf32>
    %8 = tpu.matmul %6, %7, %cst {dimension_numbers = #tpu.dot_dimension_numbers<[1], [0], [0], [1], [0, 0, 1, 1], [], []>} : vector<26x84xf32>, vector<84x156xf32>, vector<26x156xf32> -> vector<26x156xf32>
    %c768 = arith.constant 768 : index
    %c0_11 = arith.constant 0 : index
    %9 = vector.load %arg1[%c768, %c0_11] : memref<776x208xf32, #tpu.memory_space<vmem>>, vector<1x156xf32>
    %10 = vector.broadcast %9 : vector<1x156xf32> to vector<26x156xf32>
    %11 = arith.addf %8, %10 : vector<26x156xf32>
    %cst_12 = arith.constant 0.000000e+00 : f32
    %12 = vector.broadcast %cst_12 : f32 to vector<26x156xf32>
    %13 = arith.maximumf %11, %12 : vector<26x156xf32>
    %c400 = arith.constant 400 : index
    %c0_13 = arith.constant 0 : index
    %14 = vector.load %arg1[%c400, %c0_13] : memref<776x208xf32, #tpu.memory_space<vmem>>, vector<32x26xf32>
    %cst_14 = arith.constant dense<0.000000e+00> : vector<32x156xf32>
    %15 = tpu.matmul %14, %13, %cst_14 {dimension_numbers = #tpu.dot_dimension_numbers<[1], [0], [0], [1], [0, 0, 1, 1], [], []>} : vector<32x26xf32>, vector<26x156xf32>, vector<32x156xf32> -> vector<32x156xf32>
    %16 = vector.extract_strided_slice %15 {offsets = [0, 0], sizes = [13, 156], strides = [1, 1]} : vector<32x156xf32> to vector<13x156xf32>
    %17 = vector.extract_strided_slice %15 {offsets = [16, 0], sizes = [13, 156], strides = [1, 1]} : vector<32x156xf32> to vector<13x156xf32>
    %18 = arith.maximumf %16, %17 : vector<13x156xf32>
    %c448 = arith.constant 448 : index
    %c0_15 = arith.constant 0 : index
    %19 = vector.load %arg1[%c448, %c0_15] : memref<776x208xf32, #tpu.memory_space<vmem>>, vector<156x206xf32>
    %cst_16 = arith.constant dense<0.000000e+00> : vector<13x206xf32>
    %20 = tpu.matmul %18, %19, %cst_16 {dimension_numbers = #tpu.dot_dimension_numbers<[1], [0], [0], [1], [0, 0, 1, 1], [], []>} : vector<13x156xf32>, vector<156x206xf32>, vector<13x206xf32> -> vector<13x206xf32>
    %21 = vector.extract_strided_slice %20 {offsets = [0, 0], sizes = [13, 78], strides = [1, 1]} : vector<13x206xf32> to vector<13x78xf32>
    %22 = vector.extract_strided_slice %20 {offsets = [0, 128], sizes = [13, 78], strides = [1, 1]} : vector<13x206xf32> to vector<13x78xf32>
    %23 = arith.maximumf %21, %22 : vector<13x78xf32>
    %24 = vector.extract_strided_slice %23 {offsets = [0, 0], sizes = [10, 78], strides = [1, 1]} : vector<13x78xf32> to vector<10x78xf32>
    %c0_17 = arith.constant 0 : index
    %c128 = arith.constant 128 : index
    %25 = vector.load %arg4[%c0_17, %c128] : memref<32x512xf32, #tpu.memory_space<vmem>>, vector<10x78xf32>
    tpu.vector_store %arg4[%c0_17, %c128], %24 {strides = array<i32>} : memref<32x512xf32, #tpu.memory_space<vmem>>, vector<10x78xf32>,
    %26 = vector.extract_strided_slice %23 {offsets = [1, 0], sizes = [10, 78], strides = [1, 1]} : vector<13x78xf32> to vector<10x78xf32>
    %c0_18 = arith.constant 0 : index
    %c206 = arith.constant 206 : index
    %27 = vector.load %arg4[%c0_18, %c206] : memref<32x512xf32, #tpu.memory_space<vmem>>, vector<10x78xf32>
    tpu.vector_store %arg4[%c0_18, %c206], %26 {strides = array<i32>} : memref<32x512xf32, #tpu.memory_space<vmem>>, vector<10x78xf32>,
    %28 = vector.extract_strided_slice %23 {offsets = [2, 0], sizes = [10, 78], strides = [1, 1]} : vector<13x78xf32> to vector<10x78xf32>
    %c0_19 = arith.constant 0 : index
    %c284 = arith.constant 284 : index
    %29 = vector.load %arg4[%c0_19, %c284] : memref<32x512xf32, #tpu.memory_space<vmem>>, vector<10x78xf32>
    tpu.vector_store %arg4[%c0_19, %c284], %28 {strides = array<i32>} : memref<32x512xf32, #tpu.memory_space<vmem>>, vector<10x78xf32>,
    %30 = vector.extract_strided_slice %23 {offsets = [3, 0], sizes = [10, 78], strides = [1, 1]} : vector<13x78xf32> to vector<10x78xf32>
    %c0_20 = arith.constant 0 : index
    %c362 = arith.constant 362 : index
    %31 = vector.load %arg4[%c0_20, %c362] : memref<32x512xf32, #tpu.memory_space<vmem>>, vector<10x78xf32>
    tpu.vector_store %arg4[%c0_20, %c362], %30 {strides = array<i32>} : memref<32x512xf32, #tpu.memory_space<vmem>>, vector<10x78xf32>,
    %c0_21 = arith.constant 0 : index
    %c128_22 = arith.constant 128 : index
    %32 = vector.load %arg4[%c0_21, %c128_22] : memref<32x512xf32, #tpu.memory_space<vmem>>, vector<10x312xf32>
    %c88 = arith.constant 88 : index
    %c0_23 = arith.constant 0 : index
    %33 = vector.load %arg1[%c88, %c0_23] : memref<776x208xf32, #tpu.memory_space<vmem>>, vector<312x160xf32>
    %cst_24 = arith.constant dense<0.000000e+00> : vector<10x160xf32>
    %34 = tpu.matmul %32, %33, %cst_24 {dimension_numbers = #tpu.dot_dimension_numbers<[1], [0], [0], [1], [0, 0, 1, 1], [], []>} : vector<10x312xf32>, vector<312x160xf32>, vector<10x160xf32> -> vector<10x160xf32>
    %c769 = arith.constant 769 : index
    %c0_25 = arith.constant 0 : index
    %35 = vector.load %arg1[%c769, %c0_25] : memref<776x208xf32, #tpu.memory_space<vmem>>, vector<1x160xf32>
    %36 = vector.broadcast %35 : vector<1x160xf32> to vector<10x160xf32>
    %37 = arith.addf %34, %36 : vector<10x160xf32>
    %cst_26 = arith.constant 0.000000e+00 : f32
    %38 = vector.broadcast %cst_26 : f32 to vector<10x160xf32>
    %39 = arith.maximumf %37, %38 : vector<10x160xf32>
    %c432 = arith.constant 432 : index
    %c0_27 = arith.constant 0 : index
    %40 = vector.load %arg1[%c432, %c0_27] : memref<776x208xf32, #tpu.memory_space<vmem>>, vector<16x10xf32>
    %cst_28 = arith.constant dense<0.000000e+00> : vector<16x160xf32>
    %41 = tpu.matmul %40, %39, %cst_28 {dimension_numbers = #tpu.dot_dimension_numbers<[1], [0], [0], [1], [0, 0, 1, 1], [], []>} : vector<16x10xf32>, vector<10x160xf32>, vector<16x160xf32> -> vector<16x160xf32>
    %42 = vector.extract_strided_slice %41 {offsets = [0, 0], sizes = [5, 160], strides = [1, 1]} : vector<16x160xf32> to vector<5x160xf32>
    %43 = vector.extract_strided_slice %41 {offsets = [8, 0], sizes = [5, 160], strides = [1, 1]} : vector<16x160xf32> to vector<5x160xf32>
    %44 = arith.maximumf %42, %43 : vector<5x160xf32>
    %c608 = arith.constant 608 : index
    %c0_29 = arith.constant 0 : index
    %45 = vector.load %arg1[%c608, %c0_29] : memref<776x208xf32, #tpu.memory_space<vmem>>, vector<160x208xf32>
    %cst_30 = arith.constant dense<0.000000e+00> : vector<5x208xf32>
    %46 = tpu.matmul %44, %45, %cst_30 {dimension_numbers = #tpu.dot_dimension_numbers<[1], [0], [0], [1], [0, 0, 1, 1], [], []>} : vector<5x160xf32>, vector<160x208xf32>, vector<5x208xf32> -> vector<5x208xf32>
    %47 = vector.extract_strided_slice %46 {offsets = [0, 0], sizes = [5, 80], strides = [1, 1]} : vector<5x208xf32> to vector<5x80xf32>
    %48 = vector.extract_strided_slice %46 {offsets = [0, 128], sizes = [5, 80], strides = [1, 1]} : vector<5x208xf32> to vector<5x80xf32>
    %49 = arith.maximumf %47, %48 : vector<5x80xf32>
    %50 = vector.extract_strided_slice %49 {offsets = [0, 0], sizes = [1, 80], strides = [1, 1]} : vector<5x80xf32> to vector<1x80xf32>
    %c26 = arith.constant 26 : index
    %c0_31 = arith.constant 0 : index
    %51 = vector.load %arg4[%c26, %c0_31] : memref<32x512xf32, #tpu.memory_space<vmem>>, vector<1x80xf32>
    tpu.vector_store %arg4[%c26, %c0_31], %50 {strides = array<i32>} : memref<32x512xf32, #tpu.memory_space<vmem>>, vector<1x80xf32>,
    %52 = vector.extract_strided_slice %49 {offsets = [1, 0], sizes = [1, 80], strides = [1, 1]} : vector<5x80xf32> to vector<1x80xf32>
    %c26_32 = arith.constant 26 : index
    %c80 = arith.constant 80 : index
    %53 = vector.load %arg4[%c26_32, %c80] : memref<32x512xf32, #tpu.memory_space<vmem>>, vector<1x80xf32>
    tpu.vector_store %arg4[%c26_32, %c80], %52 {strides = array<i32>} : memref<32x512xf32, #tpu.memory_space<vmem>>, vector<1x80xf32>,
    %54 = vector.extract_strided_slice %49 {offsets = [2, 0], sizes = [1, 80], strides = [1, 1]} : vector<5x80xf32> to vector<1x80xf32>
    %c26_33 = arith.constant 26 : index
    %c160 = arith.constant 160 : index
    %55 = vector.load %arg4[%c26_33, %c160] : memref<32x512xf32, #tpu.memory_space<vmem>>, vector<1x80xf32>
    tpu.vector_store %arg4[%c26_33, %c160], %54 {strides = array<i32>} : memref<32x512xf32, #tpu.memory_space<vmem>>, vector<1x80xf32>,
    %56 = vector.extract_strided_slice %49 {offsets = [3, 0], sizes = [1, 80], strides = [1, 1]} : vector<5x80xf32> to vector<1x80xf32>
    %c26_34 = arith.constant 26 : index
    %c240 = arith.constant 240 : index
    %57 = vector.load %arg4[%c26_34, %c240] : memref<32x512xf32, #tpu.memory_space<vmem>>, vector<1x80xf32>
    tpu.vector_store %arg4[%c26_34, %c240], %56 {strides = array<i32>} : memref<32x512xf32, #tpu.memory_space<vmem>>, vector<1x80xf32>,
    %58 = vector.extract_strided_slice %49 {offsets = [4, 0], sizes = [1, 80], strides = [1, 1]} : vector<5x80xf32> to vector<1x80xf32>
    %c26_35 = arith.constant 26 : index
    %c320 = arith.constant 320 : index
    %59 = vector.load %arg4[%c26_35, %c320] : memref<32x512xf32, #tpu.memory_space<vmem>>, vector<1x80xf32>
    tpu.vector_store %arg4[%c26_35, %c320], %58 {strides = array<i32>} : memref<32x512xf32, #tpu.memory_space<vmem>>, vector<1x80xf32>,
    %c26_36 = arith.constant 26 : index
    %c0_37 = arith.constant 0 : index
    %60 = vector.load %arg4[%c26_36, %c0_37] : memref<32x512xf32, #tpu.memory_space<vmem>>, vector<1x400xf32>
    %c0_38 = arith.constant 0 : index
    %c0_39 = arith.constant 0 : index
    %61 = vector.load %arg2[%c0_38, %c0_39] : memref<608x120xf32, #tpu.memory_space<vmem>>, vector<400x120xf32>
    %cst_40 = arith.constant dense<0.000000e+00> : vector<1x120xf32>
    %62 = tpu.matmul %60, %61, %cst_40 {dimension_numbers = #tpu.dot_dimension_numbers<[1], [0], [0], [1], [0, 0, 1, 1], [], []>} : vector<1x400xf32>, vector<400x120xf32>, vector<1x120xf32> -> vector<1x120xf32>
    %c770 = arith.constant 770 : index
    %c0_41 = arith.constant 0 : index
    %63 = vector.load %arg1[%c770, %c0_41] : memref<776x208xf32, #tpu.memory_space<vmem>>, vector<1x120xf32>
    %64 = arith.addf %62, %63 : vector<1x120xf32>
    %cst_42 = arith.constant 0.000000e+00 : f32
    %65 = vector.broadcast %cst_42 : f32 to vector<1x120xf32>
    %66 = arith.maximumf %64, %65 : vector<1x120xf32>
    %c400_43 = arith.constant 400 : index
    %c0_44 = arith.constant 0 : index
    %67 = vector.load %arg2[%c400_43, %c0_44] : memref<608x120xf32, #tpu.memory_space<vmem>>, vector<120x84xf32>
    %cst_45 = arith.constant dense<0.000000e+00> : vector<1x84xf32>
    %68 = tpu.matmul %66, %67, %cst_45 {dimension_numbers = #tpu.dot_dimension_numbers<[1], [0], [0], [1], [0, 0, 1, 1], [], []>} : vector<1x120xf32>, vector<120x84xf32>, vector<1x84xf32> -> vector<1x84xf32>
    %c771 = arith.constant 771 : index
    %c0_46 = arith.constant 0 : index
    %69 = vector.load %arg1[%c771, %c0_46] : memref<776x208xf32, #tpu.memory_space<vmem>>, vector<1x84xf32>
    %70 = arith.addf %68, %69 : vector<1x84xf32>
    %cst_47 = arith.constant 0.000000e+00 : f32
    %71 = vector.broadcast %cst_47 : f32 to vector<1x84xf32>
    %72 = arith.maximumf %70, %71 : vector<1x84xf32>
    %c520 = arith.constant 520 : index
    %c0_48 = arith.constant 0 : index
    %73 = vector.load %arg2[%c520, %c0_48] : memref<608x120xf32, #tpu.memory_space<vmem>>, vector<84x10xf32>
    %cst_49 = arith.constant dense<0.000000e+00> : vector<1x10xf32>
    %74 = tpu.matmul %72, %73, %cst_49 {dimension_numbers = #tpu.dot_dimension_numbers<[1], [0], [0], [1], [0, 0, 1, 1], [], []>} : vector<1x84xf32>, vector<84x10xf32>, vector<1x10xf32> -> vector<1x10xf32>
    %c772 = arith.constant 772 : index
    %c0_50 = arith.constant 0 : index
    %75 = vector.load %arg1[%c772, %c0_50] : memref<776x208xf32, #tpu.memory_space<vmem>>, vector<1x10xf32>
    %76 = arith.addf %74, %75 : vector<1x10xf32>
    %c0_51 = arith.constant 0 : index
    %c0_52 = arith.constant 0 : index
    %77 = vector.load %arg3[%c0_51, %c0_52] : memref<1x10xf32, #tpu.memory_space<vmem>>, vector<1x10xf32>
    tpu.vector_store %arg3[%c0_51, %c0_52], %76 {strides = array<i32>} : memref<1x10xf32, #tpu.memory_space<vmem>>, vector<1x10xf32>,
    return
  }
}

</mosaic_0001>

<llo_original>
// kernel: net_forward.1
$region0: #{net_forward.1}
  #allocation0 [shape = 'u32[]', space=smem, size = 0x4, offset = 0x4, fixed_abs, tag = 'smem constant byte address 0x4 - core index']
  #allocation1 [shape = 'u32[144,128]{1,0:T(1,128)}', space=vmem, size = 0x12000, scoped, tag = 'internal scratch']
  #allocation2 [shape = 'f32[32,512]{1,0:T(8,128)}', space=vmem, size = 0x10000, scoped, tag = 'scratch operand']
  %s0 = inlined_call_operand.vmem [shape: f32[28,28], index: 0, kind: input, shape index: {}]
  %s1 = inlined_call_operand.vmem [shape: f32[776,208], index: 1, kind: input, shape index: {}]
  %s2 = inlined_call_operand.vmem [shape: f32[608,120], index: 2, kind: input, shape index: {}]
  %s3 = inlined_call_operand.hbm [shape: f32[1,10], index: 3, kind: output, shape index: {}]
  %s4 = sld [smem:[#allocation0]]
  $region22: #{net_forward.1} parent=0
    _
  %s6 = ssub.s32 1, %s4
  %s7 = scalar_select 0, %s6, %s4
  $region1: #{net_forward.1} parent=0
    #allocation3 [shape = 'u8[512]{0}', space=vmem, size = 0x400, scoped, tag = 'output window, operand 0, single buffered']
    #allocation4 [shape = 's32[1]{0}', space=sflag, size = 0x4, scoped, tag = 'scoped memory for net_forward.1']
    %8 = vsyncpa [#allocation4], 0
    // Predicated region
    $region2: #{net_forward.1} parent=1 // pred_check
      _
    $region3: #{net_forward.1} parent=1 // pred_check_branch
      %10 = sbr.rel (0) target = $region5
    $region4: #{net_forward.1} parent=1 // pred_region
      _
    $region5: #{net_forward.1} parent=1 // pred_fallthru
      _
    // Predicated region
    $region6: #{net_forward.1} parent=1 // pred_check
      _
    $region7: #{net_forward.1} parent=1 // pred_check_branch
      %12 = sbr.rel (0) target = $region9
    $region8: #{net_forward.1} parent=1 // pred_region
      _
    $region9: #{net_forward.1} parent=1 // pred_fallthru
      _
    // Predicated region
    $region10: #{net_forward.1} parent=1 // pred_check
      _
    $region11: #{net_forward.1} parent=1 // pred_check_branch
      %14 = sbr.rel (0) target = $region13
    $region12: #{net_forward.1} parent=1 // pred_region
      _
    $region13: #{net_forward.1} parent=1 // pred_fallthru
      _
    %v15 = vld [vmem:[%s0] sm:$0xff]
    %v16 = vld [vmem:[%s0 + $0x8] sm:$0xff]
    %v17 = vld [vmem:[%s0 + $0x10] sm:$0xff]
    %v18 = vld [vmem:[%s0 + $0x18] sm:$0x3]
    %vm19 = vcmask 228352
    %20 = vst.msk [vmem:[#allocation2] sm:$0xff] %vm19, %v15
    %21 = vst.msk [vmem:[#allocation2 + $0x20] sm:$0xff] %vm19, %v16
    %22 = vst.msk [vmem:[#allocation2 + $0x40] sm:$0xff] %vm19, %v17
    %vm23 = vcmask 222208
    %24 = vst.msk [vmem:[#allocation2 + $0x60] sm:$0x3] %vm23, %v18
    %v25 = vld [vmem:[%s0 + $0x1] sm:$0xff]
    %v26 = vld [vmem:[%s0 + $0x9] sm:$0xff]
    %v27 = vld [vmem:[%s0 + $0x11] sm:$0xff]
    %v28 = vld [vmem:[%s0 + $0x19] sm:$0x3]
    %33 = vrot.lane.b32.xlu0 %v25, 28
    %v34 = vpop.permute.xlu0 %33
    %35 = vrot.lane.b32.xlu0 %v26, 28
    %v36 = vpop.permute.xlu0 %35
    %37 = vrot.lane.b32.xlu0 %v27, 28
    %v38 = vpop.permute.xlu0 %37
    %39 = vrot.lane.b32.xlu0 %v28, 28
    %v40 = vpop.permute.xlu0 %39
    %vm45 = vcmask 457952
    %46 = vst.msk [vmem:[#allocation2] sm:$0xff] %vm45, %v34
    %47 = vst.msk [vmem:[#allocation2 + $0x20] sm:$0xff] %vm45, %v36
    %48 = vst.msk [vmem:[#allocation2 + $0x40] sm:$0xff] %vm45, %v38
    %vm49 = vcmask 451808
    %50 = vst.msk [vmem:[#allocation2 + $0x60] sm:$0x3] %vm49, %v40
    %v51 = vld [vmem:[%s0 + $0x2] sm:$0xff]
    %v52 = vld [vmem:[%s0 + $0xa] sm:$0xff]
    %v53 = vld [vmem:[%s0 + $0x12] sm:$0xff]
    %v54 = vld [vmem:[%s0 + $0x1a] sm:$0x3]
    %59 = vrot.lane.b32.xlu0 %v51, 56
    %v60 = vpop.permute.xlu0 %59
    %61 = vrot.lane.b32.xlu0 %v52, 56
    %v62 = vpop.permute.xlu0 %61
    %63 = vrot.lane.b32.xlu0 %v53, 56
    %v64 = vpop.permute.xlu0 %63
    %65 = vrot.lane.b32.xlu0 %v54, 56
    %v66 = vpop.permute.xlu0 %65
    %vm71 = vcmask 687552
    %72 = vst.msk [vmem:[#allocation2] sm:$0xff] %vm71, %v60
    %73 = vst.msk [vmem:[#allocation2 + $0x20] sm:$0xff] %vm71, %v62
    %74 = vst.msk [vmem:[#allocation2 + $0x40] sm:$0xff] %vm71, %v64
    %vm75 = vcmask 681408
    %76 = vst.msk [vmem:[#allocation2 + $0x60] sm:$0x3] %vm75, %v66
    %v77 = vld [vmem:[#allocation2] sm:$0xff]
    %v78 = vld [vmem:[#allocation2 + $0x20] sm:$0xff]
    %v79 = vld [vmem:[#allocation2 + $0x40] sm:$0xff]
    %v80 = vld [vmem:[#allocation2 + $0x60] sm:$0x3]
    %v81 = vld [vmem:[%s1] sm:$0xff]
    %v82 = vld [vmem:[%s1 + $0x8] sm:$0xff]
    %v83 = vld [vmem:[%s1 + $0x10] sm:$0xff]
    %v84 = vld [vmem:[%s1 + $0x18] sm:$0xff]
    %v85 = vld [vmem:[%s1 + $0x20] sm:$0xff]
    %v86 = vld [vmem:[%s1 + $0x28] sm:$0xff]
    %v87 = vld [vmem:[%s1 + $0x30] sm:$0xff]
    %v88 = vld [vmem:[%s1 + $0x38] sm:$0xff]
    %v89 = vld [vmem:[%s1 + $0x40] sm:$0xff]
    %v90 = vld [vmem:[%s1 + $0x48] sm:$0xff]
    %v91 = vld [vmem:[%s1 + $0x50] sm:$0xff]
    %v92 = vld [vmem:[%s1 + $0x58] sm:$0xff]
    %v93 = vld [vmem:[%s1 + $0x60] sm:$0xff]
    %v94 = vld [vmem:[%s1 + $0x68] sm:$0xff]
    %v95 = vld [vmem:[%s1 + $0x70] sm:$0xff]
    %v96 = vld [vmem:[%s1 + $0x78] sm:$0xff]
    %v97 = vld [vmem:[%s1 + $0x80] sm:$0xff]
    %v98 = vld [vmem:[%s1 + $0x88] sm:$0xff]
    %v99 = vld [vmem:[%s1 + $0x90] sm:$0xff]
    %v100 = vld [vmem:[%s1 + $0x98] sm:$0xff]
    %v101 = vld [vmem:[%s1 + $0xa0] sm:$0xf]
    %v102 = vld [vmem:[%s1 + $0xa8] sm:$0xf]
    %s103 = scalar_lea.vmem %s1, 1536
    %v104 = vld [vmem:[%s103] ss:$8 sm:$0x3]
    %v106 = vlaneseq
    %v107 = vshrl.u32 %v106, 7
    %v108 = vsub.s32 0, %v107
    %v109 = vrot.slane %v104, %v108
    %v110 = vlaneseq
    %v111 = vshrl.u32 %v110, 7
    %v112 = vsub.s32 1, %v111
    %v113 = vrot.slane %v104, %v112
    %vm116 = vcmask 687104
    %v118 = vsel %vm116, %v77, 0
    %v121 = vsel %vm116, %v78, 0
    %v124 = vsel %vm116, %v79, 0
    %v127 = vsel %vm116, %v80, 0
    %vm129 = vcmask 1043456
    %v131 = vsel %vm129, %v101, 0
    %v134 = vsel %vm129, %v102, 0
    %136 = vmatprep.subr.mxu0 0.0
    %137 = vmatpush1.msra.mxu0 0.0
    %138 = vmatprep.subr.mxu0 0.0
    %139 = vmatpush1.msra.mxu0 0.0
    %140 = vmatprep.subr.mxu0 0.0
    %141 = vmatpush1.msra.mxu0 0.0
    %142 = vmatprep.subr.mxu0 0.0
    %143 = vmatpush1.msra.mxu0 0.0
    %144 = vmatprep.subr.mxu0 0.0
    %145 = vmatpush1.msra.mxu0 0.0
    %146 = vmatprep.subr.mxu0 %v134
    %147 = vmatpush1.msra.mxu0 %v131
    %148 = vmatprep.subr.mxu0 %v100
    %149 = vmatpush1.msra.mxu0 %v99
    %150 = vmatprep.subr.mxu0 %v98
    %151 = vmatpush1.msra.mxu0 %v97
    %152 = vmatprep.subr.mxu0 %v96
    %153 = vmatpush1.msra.mxu0 %v95
    %154 = vmatprep.subr.mxu0 %v94
    %155 = vmatpush1.msra.mxu0 %v93
    %156 = vmatprep.subr.mxu0 %v92
    %157 = vmatpush1.msra.mxu0 %v91
    %158 = vmatprep.subr.mxu0 %v90
    %159 = vmatpush1.msra.mxu0 %v89
    %160 = vmatprep.subr.mxu0 %v88
    %161 = vmatpush1.msra.mxu0 %v87
    %162 = vmatprep.subr.mxu0 %v86
    %163 = vmatpush1.msra.mxu0 %v85
    %164 = vmatprep.subr.mxu0 %v84
    %165 = vmatpush1.msra.mxu0 %v83
    %166 = vmatprep.subr.mxu0 %v82
    %167 = vmatpush1.msra.mxu0 %v81
    %168 = vmatprep.subr.mxu0 0.0
    %169 = vmatpush2.msra.mxu0 0.0
    %170 = vmatprep.subr.mxu0 0.0
    %171 = vmatpush2.msra.mxu0 0.0
    %172 = vmatprep.subr.mxu0 0.0
    %173 = vmatpush2.msra.mxu0 0.0
    %174 = vmatprep.subr.mxu0 0.0
    %175 = vmatpush2.msra.mxu0 0.0
    %176 = vmatprep.subr.mxu0 0.0
    %177 = vmatpush2.msra.mxu0 0.0
    %178 = vmatprep.subr.mxu0 0.0
    %179 = vmatpush2.msra.mxu0 0.0
    %180 = vmatprep.subr.mxu0 0.0
    %181 = vmatpush2.msra.mxu0 0.0
    %182 = vmatprep.subr.mxu0 0.0
    %183 = vmatpush2.msra.mxu0 0.0
    %184 = vmatprep.subr.mxu0 0.0
    %185 = vmatpush2.msra.mxu0 0.0
    %186 = vmatprep.subr.mxu0 0.0
    %187 = vmatpush2.msra.mxu0 0.0
    %188 = vmatprep.subr.mxu0 0.0
    %189 = vmatpush2.msra.mxu0 0.0
    %190 = vmatprep.subr.mxu0 0.0
    %191 = vmatpush2.msra.mxu0 0.0
    %192 = vmatprep.subr.mxu0 0.0
    %193 = vmatpush2.msra.mxu0 0.0
    %194 = vmatprep.subr.mxu0 0.0
    %195 = vmatpush2.msra.mxu0 0.0
    %196 = vmatprep.subr.mxu0 0.0
    %197 = vmatpush2.msra.mxu0 0.0
    %198 = vmatprep.subr.mxu0 0.0
    %199 = vmatpush2.msra.mxu0 0.0
    %200 = vmatprep.mubr.f32.mxu0 0.0
    %201 = vmatmul.mubr.f32.gmra.mxu0 %v118
    %v202 = vpop.f32.mrf.mxu0
    %v203 = vadd.f32 %v109, %v202
    %v204 = vpop.f32.mrf.mxu0
    %v205 = vadd.f32 %v113, %v204
    %206 = vmatprep.mubr.f32.mxu0 0.0
    %207 = vmatmul.mubr.f32.gmra.mxu0 %v121
    %v208 = vpop.f32.mrf.mxu0
    %v209 = vadd.f32 %v109, %v208
    %v210 = vpop.f32.mrf.mxu0
    %v211 = vadd.f32 %v113, %v210
    %212 = vmatprep.mubr.f32.mxu0 0.0
    %213 = vmatmul.mubr.f32.gmra.mxu0 %v124
    %v214 = vpop.f32.mrf.mxu0
    %v215 = vadd.f32 %v109, %v214
    %v216 = vpop.f32.mrf.mxu0
    %v217 = vadd.f32 %v113, %v216
    %218 = vmatprep.mubr.f32.mxu0 0.0
    %219 = vmatmul.mubr.f32.gmra.mxu0 %v127
    %v220 = vpop.f32.mrf.mxu0
    %v221 = vadd.f32 %v109, %v220
    %v222 = vpop.f32.mrf.mxu0
    %v223 = vadd.f32 %v113, %v222
    %224 = vdwg.mxu0
    %v225 = vmax.f32 %v203, 0.0
    %v226 = vmax.f32 %v205, 0.0
    %v227 = vmax.f32 %v209, 0.0
    %v228 = vmax.f32 %v211, 0.0
    %v229 = vmax.f32 %v215, 0.0
    %v230 = vmax.f32 %v217, 0.0
    %v231 = vmax.f32 %v221, 0.0
    %v232 = vmax.f32 %v223, 0.0
    %v233 = vld [vmem:[%s1 + $0x320] sm:$0xff]
    %v234 = vld [vmem:[%s1 + $0x330] sm:$0xff]
    %v235 = vld [vmem:[%s1 + $0x340] sm:$0xff]
    %v236 = vld [vmem:[%s1 + $0x350] sm:$0xff]
    %vm237 = vcmask 211968
    %v239 = vsel %vm237, %v233, 0
    %v242 = vsel %vm237, %v234, 0
    %v245 = vsel %vm237, %v235, 0
    %v248 = vsel %vm237, %v236, 0
    %vm250 = vcmask 1041408
    %v252 = vsel %vm250, %v231, 0
    %v255 = vsel %vm250, %v232, 0
    %257 = vmatprep.subr.mxu0 0.0
    %258 = vmatpush1.msra.mxu0 0.0
    %259 = vmatprep.subr.mxu0 0.0
    %260 = vmatpush1.msra.mxu0 0.0
    %261 = vmatprep.subr.mxu0 0.0
    %262 = vmatpush1.msra.mxu0 0.0
    %263 = vmatprep.subr.mxu0 0.0
    %264 = vmatpush1.msra.mxu0 0.0
    %265 = vmatprep.subr.mxu0 0.0
    %266 = vmatpush1.msra.mxu0 0.0
    %267 = vmatprep.subr.mxu0 0.0
    %268 = vmatpush1.msra.mxu0 0.0
    %269 = vmatprep.subr.mxu0 0.0
    %270 = vmatpush1.msra.mxu0 0.0
    %271 = vmatprep.subr.mxu0 0.0
    %272 = vmatpush1.msra.mxu0 0.0
    %273 = vmatprep.subr.mxu0 0.0
    %274 = vmatpush1.msra.mxu0 0.0
    %275 = vmatprep.subr.mxu0 0.0
    %276 = vmatpush1.msra.mxu0 0.0
    %277 = vmatprep.subr.mxu0 0.0
    %278 = vmatpush1.msra.mxu0 0.0
    %279 = vmatprep.subr.mxu0 0.0
    %280 = vmatpush1.msra.mxu0 0.0
    %281 = vmatprep.subr.mxu0 %v255
    %282 = vmatpush1.msra.mxu0 %v252
    %283 = vmatprep.subr.mxu0 %v230
    %284 = vmatpush1.msra.mxu0 %v229
    %285 = vmatprep.subr.mxu0 %v228
    %286 = vmatpush1.msra.mxu0 %v227
    %287 = vmatprep.subr.mxu0 %v226
    %288 = vmatpush1.msra.mxu0 %v225
    %289 = vmatprep.subr.mxu0 0.0
    %290 = vmatpush2.msra.mxu0 0.0
    %291 = vmatprep.subr.mxu0 0.0
    %292 = vmatpush2.msra.mxu0 0.0
    %293 = vmatprep.subr.mxu0 0.0
    %294 = vmatpush2.msra.mxu0 0.0
    %295 = vmatprep.subr.mxu0 0.0
    %296 = vmatpush2.msra.mxu0 0.0
    %297 = vmatprep.subr.mxu0 0.0
    %298 = vmatpush2.msra.mxu0 0.0
    %299 = vmatprep.subr.mxu0 0.0
    %300 = vmatpush2.msra.mxu0 0.0
    %301 = vmatprep.subr.mxu0 0.0
    %302 = vmatpush2.msra.mxu0 0.0
    %303 = vmatprep.subr.mxu0 0.0
    %304 = vmatpush2.msra.mxu0 0.0
    %305 = vmatprep.subr.mxu0 0.0
    %306 = vmatpush2.msra.mxu0 0.0
    %307 = vmatprep.subr.mxu0 0.0
    %308 = vmatpush2.msra.mxu0 0.0
    %309 = vmatprep.subr.mxu0 0.0
    %310 = vmatpush2.msra.mxu0 0.0
    %311 = vmatprep.subr.mxu0 0.0
    %312 = vmatpush2.msra.mxu0 0.0
    %313 = vmatprep.subr.mxu0 0.0
    %314 = vmatpush2.msra.mxu0 0.0
    %315 = vmatprep.subr.mxu0 0.0
    %316 = vmatpush2.msra.mxu0 0.0
    %317 = vmatprep.subr.mxu0 0.0
    %318 = vmatpush2.msra.mxu0 0.0
    %319 = vmatprep.subr.mxu0 0.0
    %320 = vmatpush2.msra.mxu0 0.0
    %321 = vmatprep.mubr.f32.mxu0 0.0
    %322 = vmatmul.mubr.f32.gmra.mxu0 %v239
    %v323 = vpop.f32.mrf.mxu0
    %v324 = vadd.f32 0.0, %v323
    %v325 = vpop.f32.mrf.mxu0
    %v326 = vadd.f32 0.0, %v325
    %327 = vmatprep.mubr.f32.mxu0 0.0
    %328 = vmatmul.mubr.f32.gmra.mxu0 %v242
    %v329 = vpop.f32.mrf.mxu0
    %v330 = vadd.f32 0.0, %v329
    %v331 = vpop.f32.mrf.mxu0
    %v332 = vadd.f32 0.0, %v331
    %333 = vmatprep.mubr.f32.mxu0 0.0
    %334 = vmatmul.mubr.f32.gmra.mxu0 %v245
    %v335 = vpop.f32.mrf.mxu0
    %v336 = vadd.f32 0.0, %v335
    %v337 = vpop.f32.mrf.mxu0
    %v338 = vadd.f32 0.0, %v337
    %339 = vmatprep.mubr.f32.mxu0 0.0
    %340 = vmatmul.mubr.f32.gmra.mxu0 %v248
    %v341 = vpop.f32.mrf.mxu0
    %v342 = vadd.f32 0.0, %v341
    %v343 = vpop.f32.mrf.mxu0
    %v344 = vadd.f32 0.0, %v343
    %345 = vdwg.mxu0
    %v346 = vmax.f32 %v324, %v336
    %v347 = vmax.f32 %v326, %v338
    %v348 = vmax.f32 %v330, %v342
    %v349 = vmax.f32 %v332, %v344
    %v350 = vld [vmem:[%s1 + $0x380] sm:$0xff]
    %v351 = vld [vmem:[%s1 + $0x388] sm:$0xff]
    %v352 = vld [vmem:[%s1 + $0x390] sm:$0xff]
    %v353 = vld [vmem:[%s1 + $0x398] sm:$0xff]
    %v354 = vld [vmem:[%s1 + $0x3a0] sm:$0xff]
    %v355 = vld [vmem:[%s1 + $0x3a8] sm:$0xff]
    %v356 = vld [vmem:[%s1 + $0x3b0] sm:$0xff]
    %v357 = vld [vmem:[%s1 + $0x3b8] sm:$0xff]
    %v358 = vld [vmem:[%s1 + $0x3c0] sm:$0xff]
    %v359 = vld [vmem:[%s1 + $0x3c8] sm:$0xff]
    %v360 = vld [vmem:[%s1 + $0x3d0] sm:$0xff]
    %v361 = vld [vmem:[%s1 + $0x3d8] sm:$0xff]
    %v362 = vld [vmem:[%s1 + $0x3e0] sm:$0xff]
    %v363 = vld [vmem:[%s1 + $0x3e8] sm:$0xff]
    %v364 = vld [vmem:[%s1 + $0x3f0] sm:$0xff]
    %v365 = vld [vmem:[%s1 + $0x3f8] sm:$0xff]
    %v366 = vld [vmem:[%s1 + $0x400] sm:$0xff]
    %v367 = vld [vmem:[%s1 + $0x408] sm:$0xff]
    %v368 = vld [vmem:[%s1 + $0x410] sm:$0xff]
    %v369 = vld [vmem:[%s1 + $0x418] sm:$0xff]
    %v370 = vld [vmem:[%s1 + $0x420] sm:$0xff]
    %v371 = vld [vmem:[%s1 + $0x428] sm:$0xff]
    %v372 = vld [vmem:[%s1 + $0x430] sm:$0xff]
    %v373 = vld [vmem:[%s1 + $0x438] sm:$0xff]
    %v374 = vld [vmem:[%s1 + $0x440] sm:$0xff]
    %v375 = vld [vmem:[%s1 + $0x448] sm:$0xff]
    %v376 = vld [vmem:[%s1 + $0x450] sm:$0xff]
    %v377 = vld [vmem:[%s1 + $0x458] sm:$0xff]
    %v378 = vld [vmem:[%s1 + $0x460] sm:$0xff]
    %v379 = vld [vmem:[%s1 + $0x468] sm:$0xff]
    %v380 = vld [vmem:[%s1 + $0x470] sm:$0xff]
    %v381 = vld [vmem:[%s1 + $0x478] sm:$0xff]
    %v382 = vld [vmem:[%s1 + $0x480] sm:$0xff]
    %v383 = vld [vmem:[%s1 + $0x488] sm:$0xff]
    %v384 = vld [vmem:[%s1 + $0x490] sm:$0xff]
    %v385 = vld [vmem:[%s1 + $0x498] sm:$0xff]
    %v386 = vld [vmem:[%s1 + $0x4a0] sm:$0xff]
    %v387 = vld [vmem:[%s1 + $0x4a8] sm:$0xff]
    %v388 = vld [vmem:[%s1 + $0x4b0] sm:$0xf]
    %v389 = vld [vmem:[%s1 + $0x4b8] sm:$0xf]
    %v391 = vsel %vm19, %v347, 0
    %v394 = vsel %vm19, %v349, 0
    %v397 = vsel %vm129, %v388, 0
    %v400 = vsel %vm129, %v389, 0
    %402 = vmatprep.subr.mxu0 %v381
    %403 = vmatpush1.msra.mxu0 %v380
    %404 = vmatprep.subr.mxu0 %v379
    %405 = vmatpush1.msra.mxu0 %v378
    %406 = vmatprep.subr.mxu0 %v377
    %407 = vmatpush1.msra.mxu0 %v376
    %408 = vmatprep.subr.mxu0 %v375
    %409 = vmatpush1.msra.mxu0 %v374
    %410 = vmatprep.subr.mxu0 %v373
    %411 = vmatpush1.msra.mxu0 %v372
    %412 = vmatprep.subr.mxu0 %v371
    %413 = vmatpush1.msra.mxu0 %v370
    %414 = vmatprep.subr.mxu0 %v369
    %415 = vmatpush1.msra.mxu0 %v368
    %416 = vmatprep.subr.mxu0 %v367
    %417 = vmatpush1.msra.mxu0 %v366
    %418 = vmatprep.subr.mxu0 %v365
    %419 = vmatpush1.msra.mxu0 %v364
    %420 = vmatprep.subr.mxu0 %v363
    %421 = vmatpush1.msra.mxu0 %v362
    %422 = vmatprep.subr.mxu0 %v361
    %423 = vmatpush1.msra.mxu0 %v360
    %424 = vmatprep.subr.mxu0 %v359
    %425 = vmatpush1.msra.mxu0 %v358
    %426 = vmatprep.subr.mxu0 %v357
    %427 = vmatpush1.msra.mxu0 %v356
    %428 = vmatprep.subr.mxu0 %v355
    %429 = vmatpush1.msra.mxu0 %v354
    %430 = vmatprep.subr.mxu0 %v353
    %431 = vmatpush1.msra.mxu0 %v352
    %432 = vmatprep.subr.mxu0 %v351
    %433 = vmatpush1.msra.mxu0 %v350
    %434 = vmatprep.subr.mxu0 0.0
    %435 = vmatpush2.msra.mxu0 0.0
    %436 = vmatprep.subr.mxu0 0.0
    %437 = vmatpush2.msra.mxu0 0.0
    %438 = vmatprep.subr.mxu0 0.0
    %439 = vmatpush2.msra.mxu0 0.0
    %440 = vmatprep.subr.mxu0 0.0
    %441 = vmatpush2.msra.mxu0 0.0
    %442 = vmatprep.subr.mxu0 0.0
    %443 = vmatpush2.msra.mxu0 0.0
    %444 = vmatprep.subr.mxu0 0.0
    %445 = vmatpush2.msra.mxu0 0.0
    %446 = vmatprep.subr.mxu0 0.0
    %447 = vmatpush2.msra.mxu0 0.0
    %448 = vmatprep.subr.mxu0 0.0
    %449 = vmatpush2.msra.mxu0 0.0
    %450 = vmatprep.subr.mxu0 0.0
    %451 = vmatpush2.msra.mxu0 0.0
    %452 = vmatprep.subr.mxu0 0.0
    %453 = vmatpush2.msra.mxu0 0.0
    %454 = vmatprep.subr.mxu0 0.0
    %455 = vmatpush2.msra.mxu0 0.0
    %456 = vmatprep.subr.mxu0 0.0
    %457 = vmatpush2.msra.mxu0 0.0
    %458 = vmatprep.subr.mxu0 %v400
    %459 = vmatpush2.msra.mxu0 %v397
    %460 = vmatprep.subr.mxu0 %v387
    %461 = vmatpush2.msra.mxu0 %v386
    %462 = vmatprep.subr.mxu0 %v385
    %463 = vmatpush2.msra.mxu0 %v384
    %464 = vmatprep.subr.mxu0 %v383
    %465 = vmatpush2.msra.mxu0 %v382
    %466 = vmatprep.mubr.f32.mxu0 %v391
    %467 = vmatmul.mubr.f32.gmra.mxu0 %v346
    %v468 = vpop.f32.mrf.mxu0
    %v469 = vadd.f32 0.0, %v468
    %v470 = vpop.f32.mrf.mxu0
    %v471 = vadd.f32 0.0, %v470
    %472 = vmatprep.mubr.f32.mxu0 %v394
    %473 = vmatmul.mubr.f32.gmra.mxu0 %v348
    %v474 = vpop.f32.mrf.mxu0
    %v475 = vadd.f32 0.0, %v474
    %v476 = vpop.f32.mrf.mxu0
    %v477 = vadd.f32 0.0, %v476
    %478 = vdwg.mxu0
    %v479 = vmax.f32 %v469, %v471
    %v480 = vmax.f32 %v475, %v477
    %vm481 = vcmask 637952
    %482 = vst.msk [vmem:[#allocation2 + $0x8] sm:$0xff] %vm481, %v479
    %vm483 = vcmask 631808
    %484 = vst.msk [vmem:[#allocation2 + $0x28] sm:$0x3] %vm483, %v480
    %vm487 = vcmask 1046528
    %v488 = vrot.slane %v479, 1
    %v489 = vrot.slane %v480, 1
    %v490 = vsel %vm487, %v488, %v489
    %491 = vrot.lane.b32.xlu0 %v490, 78
    %v492 = vpop.permute.xlu0 %491
    %493 = vrot.lane.b32.xlu0 %v489, 78
    %v494 = vpop.permute.xlu0 %493
    %vm497 = vcmask 1048176
    %498 = vst.msk [vmem:[#allocation2 + $0x8] sm:$0xff] %vm497, %v492
    %499 = vst.msk [vmem:[#allocation2 + $0x10] sm:$0xff] %vm19, %v492
    %vm500 = vcmask 1042032
    %501 = vst.msk [vmem:[#allocation2 + $0x28] sm:$0x3] %vm500, %v494
    %502 = vst.msk [vmem:[#allocation2 + $0x30] sm:$0x3] %vm23, %v494
    %vm503 = vcmask 1045504
    %v504 = vrot.slane %v479, 2
    %v505 = vrot.slane %v480, 2
    %v506 = vsel %vm503, %v504, %v505
    %507 = vrot.lane.b32.xlu0 %v506, 28
    %v508 = vpop.permute.xlu0 %507
    %509 = vrot.lane.b32.xlu0 %v505, 28
    %v510 = vpop.permute.xlu0 %509
    %vm513 = vcmask 867552
    %514 = vst.msk [vmem:[#allocation2 + $0x10] sm:$0xff] %vm513, %v508
    %vm515 = vcmask 861408
    %516 = vst.msk [vmem:[#allocation2 + $0x30] sm:$0x3] %vm515, %v510
    %vm517 = vcmask 1044480
    %v518 = vrot.slane %v479, 3
    %v519 = vrot.slane %v480, 3
    %v520 = vsel %vm517, %v518, %v519
    %521 = vrot.lane.b32.xlu0 %v520, 106
    %v522 = vpop.permute.xlu0 %521
    %523 = vrot.lane.b32.xlu0 %v519, 106
    %v524 = vpop.permute.xlu0 %523
    %vm527 = vcmask 1048400
    %528 = vst.msk [vmem:[#allocation2 + $0x10] sm:$0xff] %vm527, %v522
    %vm529 = vcmask 457728
    %530 = vst.msk [vmem:[#allocation2 + $0x18] sm:$0xff] %vm529, %v522
    %vm531 = vcmask 1042256
    %532 = vst.msk [vmem:[#allocation2 + $0x30] sm:$0x3] %vm531, %v524
    %vm533 = vcmask 451584
    %534 = vst.msk [vmem:[#allocation2 + $0x38] sm:$0x3] %vm533, %v524
    %v535 = vld [vmem:[#allocation2 + $0x8] sm:$0xff]
    %v536 = vld [vmem:[#allocation2 + $0x10] sm:$0xff]
    %v537 = vld [vmem:[#allocation2 + $0x18] sm:$0xff]
    %v538 = vld [vmem:[#allocation2 + $0x28] sm:$0x3]
    %v539 = vld [vmem:[#allocation2 + $0x30] sm:$0x3]
    %v540 = vld [vmem:[#allocation2 + $0x38] sm:$0x3]
    %v541 = vld [vmem:[%s1 + $0xb0] sm:$0xff]
    %v542 = vld [vmem:[%s1 + $0xb8] sm:$0xff]
    %v543 = vld [vmem:[%s1 + $0xc0] sm:$0xff]
    %v544 = vld [vmem:[%s1 + $0xc8] sm:$0xff]
    %v545 = vld [vmem:[%s1 + $0xd0] sm:$0xff]
    %v546 = vld [vmem:[%s1 + $0xd8] sm:$0xff]
    %v547 = vld [vmem:[%s1 + $0xe0] sm:$0xff]
    %v548 = vld [vmem:[%s1 + $0xe8] sm:$0xff]
    %v549 = vld [vmem:[%s1 + $0xf0] sm:$0xff]
    %v550 = vld [vmem:[%s1 + $0xf8] sm:$0xff]
    %v551 = vld [vmem:[%s1 + $0x100] sm:$0xff]
    %v552 = vld [vmem:[%s1 + $0x108] sm:$0xff]
    %v553 = vld [vmem:[%s1 + $0x110] sm:$0xff]
    %v554 = vld [vmem:[%s1 + $0x118] sm:$0xff]
    %v555 = vld [vmem:[%s1 + $0x120] sm:$0xff]
    %v556 = vld [vmem:[%s1 + $0x128] sm:$0xff]
    %v557 = vld [vmem:[%s1 + $0x130] sm:$0xff]
    %v558 = vld [vmem:[%s1 + $0x138] sm:$0xff]
    %v559 = vld [vmem:[%s1 + $0x140] sm:$0xff]
    %v560 = vld [vmem:[%s1 + $0x148] sm:$0xff]
    %v561 = vld [vmem:[%s1 + $0x150] sm:$0xff]
    %v562 = vld [vmem:[%s1 + $0x158] sm:$0xff]
    %v563 = vld [vmem:[%s1 + $0x160] sm:$0xff]
    %v564 = vld [vmem:[%s1 + $0x168] sm:$0xff]
    %v565 = vld [vmem:[%s1 + $0x170] sm:$0xff]
    %v566 = vld [vmem:[%s1 + $0x178] sm:$0xff]
    %v567 = vld [vmem:[%s1 + $0x180] sm:$0xff]
    %v568 = vld [vmem:[%s1 + $0x188] sm:$0xff]
    %v569 = vld [vmem:[%s1 + $0x190] sm:$0xff]
    %v570 = vld [vmem:[%s1 + $0x198] sm:$0xff]
    %v571 = vld [vmem:[%s1 + $0x1a0] sm:$0xff]
    %v572 = vld [vmem:[%s1 + $0x1a8] sm:$0xff]
    %v573 = vld [vmem:[%s1 + $0x1b0] sm:$0xff]
    %v574 = vld [vmem:[%s1 + $0x1b8] sm:$0xff]
    %v575 = vld [vmem:[%s1 + $0x1c0] sm:$0xff]
    %v576 = vld [vmem:[%s1 + $0x1c8] sm:$0xff]
    %v577 = vld [vmem:[%s1 + $0x1d0] sm:$0xff]
    %v578 = vld [vmem:[%s1 + $0x1d8] sm:$0xff]
    %v579 = vld [vmem:[%s1 + $0x1e0] sm:$0xff]
    %v580 = vld [vmem:[%s1 + $0x1e8] sm:$0xff]
    %v581 = vld [vmem:[%s1 + $0x1f0] sm:$0xff]
    %v582 = vld [vmem:[%s1 + $0x1f8] sm:$0xff]
    %v583 = vld [vmem:[%s1 + $0x200] sm:$0xff]
    %v584 = vld [vmem:[%s1 + $0x208] sm:$0xff]
    %v585 = vld [vmem:[%s1 + $0x210] sm:$0xff]
    %v586 = vld [vmem:[%s1 + $0x218] sm:$0xff]
    %v587 = vld [vmem:[%s1 + $0x220] sm:$0xff]
    %v588 = vld [vmem:[%s1 + $0x228] sm:$0xff]
    %v589 = vld [vmem:[%s1 + $0x230] sm:$0xff]
    %v590 = vld [vmem:[%s1 + $0x238] sm:$0xff]
    %v591 = vld [vmem:[%s1 + $0x240] sm:$0xff]
    %v592 = vld [vmem:[%s1 + $0x248] sm:$0xff]
    %v593 = vld [vmem:[%s1 + $0x250] sm:$0xff]
    %v594 = vld [vmem:[%s1 + $0x258] sm:$0xff]
    %v595 = vld [vmem:[%s1 + $0x260] sm:$0xff]
    %v596 = vld [vmem:[%s1 + $0x268] sm:$0xff]
    %v597 = vld [vmem:[%s1 + $0x270] sm:$0xff]
    %v598 = vld [vmem:[%s1 + $0x278] sm:$0xff]
    %v599 = vld [vmem:[%s1 + $0x280] sm:$0xff]
    %v600 = vld [vmem:[%s1 + $0x288] sm:$0xff]
    %v601 = vld [vmem:[%s1 + $0x290] sm:$0xff]
    %v602 = vld [vmem:[%s1 + $0x298] sm:$0xff]
    %v603 = vld [vmem:[%s1 + $0x2a0] sm:$0xff]
    %v604 = vld [vmem:[%s1 + $0x2a8] sm:$0xff]
    %v605 = vld [vmem:[%s1 + $0x2b0] sm:$0xff]
    %v606 = vld [vmem:[%s1 + $0x2b8] sm:$0xff]
    %v607 = vld [vmem:[%s1 + $0x2c0] sm:$0xff]
    %v608 = vld [vmem:[%s1 + $0x2c8] sm:$0xff]
    %v609 = vld [vmem:[%s1 + $0x2d0] sm:$0xff]
    %v610 = vld [vmem:[%s1 + $0x2d8] sm:$0xff]
    %v611 = vld [vmem:[%s1 + $0x2e0] sm:$0xff]
    %v612 = vld [vmem:[%s1 + $0x2e8] sm:$0xff]
    %v613 = vld [vmem:[%s1 + $0x2f0] sm:$0xff]
    %v614 = vld [vmem:[%s1 + $0x2f8] sm:$0xff]
    %v615 = vld [vmem:[%s1 + $0x300] sm:$0xff]
    %v616 = vld [vmem:[%s1 + $0x308] sm:$0xff]
    %v617 = vld [vmem:[%s1 + $0x310] sm:$0xff]
    %v618 = vld [vmem:[%s1 + $0x318] sm:$0xff]
    %s619 = scalar_lea.vmem %s1, 1537
    %v620 = vld [vmem:[%s619] ss:$8 sm:$0x3]
    %v622 = vlaneseq
    %v623 = vshrl.u32 %v622, 7
    %v624 = vsub.s32 0, %v623
    %v625 = vrot.slane %v620, %v624
    %v626 = vlaneseq
    %v627 = vshrl.u32 %v626, 7
    %v628 = vsub.s32 1, %v627
    %v629 = vrot.slane %v620, %v628
    %v633 = vsel %vm529, %v537, 0
    %v636 = vsel %vm529, %v540, 0
    %638 = vmatprep.subr.mxu0 %v572
    %639 = vmatpush1.msra.mxu0 %v571
    %640 = vmatprep.subr.mxu0 %v570
    %641 = vmatpush1.msra.mxu0 %v569
    %642 = vmatprep.subr.mxu0 %v568
    %643 = vmatpush1.msra.mxu0 %v567
    %644 = vmatprep.subr.mxu0 %v566
    %645 = vmatpush1.msra.mxu0 %v565
    %646 = vmatprep.subr.mxu0 %v564
    %647 = vmatpush1.msra.mxu0 %v563
    %648 = vmatprep.subr.mxu0 %v562
    %649 = vmatpush1.msra.mxu0 %v561
    %650 = vmatprep.subr.mxu0 %v560
    %651 = vmatpush1.msra.mxu0 %v559
    %652 = vmatprep.subr.mxu0 %v558
    %653 = vmatpush1.msra.mxu0 %v557
    %654 = vmatprep.subr.mxu0 %v556
    %655 = vmatpush1.msra.mxu0 %v555
    %656 = vmatprep.subr.mxu0 %v554
    %657 = vmatpush1.msra.mxu0 %v553
    %658 = vmatprep.subr.mxu0 %v552
    %659 = vmatpush1.msra.mxu0 %v551
    %660 = vmatprep.subr.mxu0 %v550
    %661 = vmatpush1.msra.mxu0 %v549
    %662 = vmatprep.subr.mxu0 %v548
    %663 = vmatpush1.msra.mxu0 %v547
    %664 = vmatprep.subr.mxu0 %v546
    %665 = vmatpush1.msra.mxu0 %v545
    %666 = vmatprep.subr.mxu0 %v544
    %667 = vmatpush1.msra.mxu0 %v543
    %668 = vmatprep.subr.mxu0 %v542
    %669 = vmatpush1.msra.mxu0 %v541
    %670 = vmatprep.subr.mxu0 %v604
    %671 = vmatpush2.msra.mxu0 %v603
    %672 = vmatprep.subr.mxu0 %v602
    %673 = vmatpush2.msra.mxu0 %v601
    %674 = vmatprep.subr.mxu0 %v600
    %675 = vmatpush2.msra.mxu0 %v599
    %676 = vmatprep.subr.mxu0 %v598
    %677 = vmatpush2.msra.mxu0 %v597
    %678 = vmatprep.subr.mxu0 %v596
    %679 = vmatpush2.msra.mxu0 %v595
    %680 = vmatprep.subr.mxu0 %v594
    %681 = vmatpush2.msra.mxu0 %v593
    %682 = vmatprep.subr.mxu0 %v592
    %683 = vmatpush2.msra.mxu0 %v591
    %684 = vmatprep.subr.mxu0 %v590
    %685 = vmatpush2.msra.mxu0 %v589
    %686 = vmatprep.subr.mxu0 %v588
    %687 = vmatpush2.msra.mxu0 %v587
    %688 = vmatprep.subr.mxu0 %v586
    %689 = vmatpush2.msra.mxu0 %v585
    %690 = vmatprep.subr.mxu0 %v584
    %691 = vmatpush2.msra.mxu0 %v583
    %692 = vmatprep.subr.mxu0 %v582
    %693 = vmatpush2.msra.mxu0 %v581
    %694 = vmatprep.subr.mxu0 %v580
    %695 = vmatpush2.msra.mxu0 %v579
    %696 = vmatprep.subr.mxu0 %v578
    %697 = vmatpush2.msra.mxu0 %v577
    %698 = vmatprep.subr.mxu0 %v576
    %699 = vmatpush2.msra.mxu0 %v575
    %700 = vmatprep.subr.mxu0 %v574
    %701 = vmatpush2.msra.mxu0 %v573
    %702 = vmatprep.mubr.f32.mxu0 %v536
    %703 = vmatmul.mubr.f32.gmra.mxu0 %v535
    %v704 = vpop.f32.mrf.mxu0
    %v705 = vadd.f32 %v625, %v704
    %v706 = vpop.f32.mrf.mxu0
    %v707 = vadd.f32 %v629, %v706
    %708 = vmatprep.mubr.f32.mxu0 %v539
    %709 = vmatmul.mubr.f32.gmra.mxu0 %v538
    %v710 = vpop.f32.mrf.mxu0
    %v711 = vadd.f32 %v625, %v710
    %v712 = vpop.f32.mrf.mxu0
    %v713 = vadd.f32 %v629, %v712
    %714 = vdwg.mxu0
    %715 = vmatprep.subr.mxu0 0.0
    %716 = vmatpush1.msra.mxu0 0.0
    %717 = vmatprep.subr.mxu0 0.0
    %718 = vmatpush1.msra.mxu0 0.0
    %719 = vmatprep.subr.mxu0 0.0
    %720 = vmatpush1.msra.mxu0 0.0
    %721 = vmatprep.subr.mxu0 0.0
    %722 = vmatpush1.msra.mxu0 0.0
    %723 = vmatprep.subr.mxu0 0.0
    %724 = vmatpush1.msra.mxu0 0.0
    %725 = vmatprep.subr.mxu0 0.0
    %726 = vmatpush1.msra.mxu0 0.0
    %727 = vmatprep.subr.mxu0 0.0
    %728 = vmatpush1.msra.mxu0 0.0
    %729 = vmatprep.subr.mxu0 0.0
    %730 = vmatpush1.msra.mxu0 0.0
    %731 = vmatprep.subr.mxu0 0.0
    %732 = vmatpush1.msra.mxu0 0.0
    %733 = vmatprep.subr.mxu0 %v618
    %734 = vmatpush1.msra.mxu0 %v617
    %735 = vmatprep.subr.mxu0 %v616
    %736 = vmatpush1.msra.mxu0 %v615
    %737 = vmatprep.subr.mxu0 %v614
    %738 = vmatpush1.msra.mxu0 %v613
    %739 = vmatprep.subr.mxu0 %v612
    %740 = vmatpush1.msra.mxu0 %v611
    %741 = vmatprep.subr.mxu0 %v610
    %742 = vmatpush1.msra.mxu0 %v609
    %743 = vmatprep.subr.mxu0 %v608
    %744 = vmatpush1.msra.mxu0 %v607
    %745 = vmatprep.subr.mxu0 %v606
    %746 = vmatpush1.msra.mxu0 %v605
    %747 = vmatprep.subr.mxu0 0.0
    %748 = vmatpush2.msra.mxu0 0.0
    %749 = vmatprep.subr.mxu0 0.0
    %750 = vmatpush2.msra.mxu0 0.0
    %751 = vmatprep.subr.mxu0 0.0
    %752 = vmatpush2.msra.mxu0 0.0
    %753 = vmatprep.subr.mxu0 0.0
    %754 = vmatpush2.msra.mxu0 0.0
    %755 = vmatprep.subr.mxu0 0.0
    %756 = vmatpush2.msra.mxu0 0.0
    %757 = vmatprep.subr.mxu0 0.0
    %758 = vmatpush2.msra.mxu0 0.0
    %759 = vmatprep.subr.mxu0 0.0
    %760 = vmatpush2.msra.mxu0 0.0
    %761 = vmatprep.subr.mxu0 0.0
    %762 = vmatpush2.msra.mxu0 0.0
    %763 = vmatprep.subr.mxu0 0.0
    %764 = vmatpush2.msra.mxu0 0.0
    %765 = vmatprep.subr.mxu0 0.0
    %766 = vmatpush2.msra.mxu0 0.0
    %767 = vmatprep.subr.mxu0 0.0
    %768 = vmatpush2.msra.mxu0 0.0
    %769 = vmatprep.subr.mxu0 0.0
    %770 = vmatpush2.msra.mxu0 0.0
    %771 = vmatprep.subr.mxu0 0.0
    %772 = vmatpush2.msra.mxu0 0.0
    %773 = vmatprep.subr.mxu0 0.0
    %774 = vmatpush2.msra.mxu0 0.0
    %775 = vmatprep.subr.mxu0 0.0
    %776 = vmatpush2.msra.mxu0 0.0
    %777 = vmatprep.subr.mxu0 0.0
    %778 = vmatpush2.msra.mxu0 0.0
    %779 = vmatprep.mubr.f32.mxu0 0.0
    %780 = vmatmul.mubr.f32.gmra.mxu0 %v633
    %v781 = vpop.f32.mrf.mxu0
    %v782 = vadd.f32 %v705, %v781
    %v783 = vpop.f32.mrf.mxu0
    %v784 = vadd.f32 %v707, %v783
    %785 = vmatprep.mubr.f32.mxu0 0.0
    %786 = vmatmul.mubr.f32.gmra.mxu0 %v636
    %v787 = vpop.f32.mrf.mxu0
    %v788 = vadd.f32 %v711, %v787
    %v789 = vpop.f32.mrf.mxu0
    %v790 = vadd.f32 %v713, %v789
    %791 = vdwg.mxu0
    %v792 = vmax.f32 %v782, 0.0
    %v793 = vmax.f32 %v784, 0.0
    %v794 = vmax.f32 %v788, 0.0
    %v795 = vmax.f32 %v790, 0.0
    %v796 = vld [vmem:[%s1 + $0x360] sm:$0xff]
    %v797 = vld [vmem:[%s1 + $0x370] sm:$0xff]
    %vm798 = vcmask 80896
    %v800 = vsel %vm798, %v796, 0
    %v803 = vsel %vm798, %v797, 0
    %v806 = vsel %vm250, %v794, 0
    %v809 = vsel %vm250, %v795, 0
    %811 = vmatprep.subr.mxu0 0.0
    %812 = vmatpush1.msra.mxu0 0.0
    %813 = vmatprep.subr.mxu0 0.0
    %814 = vmatpush1.msra.mxu0 0.0
    %815 = vmatprep.subr.mxu0 0.0
    %816 = vmatpush1.msra.mxu0 0.0
    %817 = vmatprep.subr.mxu0 0.0
    %818 = vmatpush1.msra.mxu0 0.0
    %819 = vmatprep.subr.mxu0 0.0
    %820 = vmatpush1.msra.mxu0 0.0
    %821 = vmatprep.subr.mxu0 0.0
    %822 = vmatpush1.msra.mxu0 0.0
    %823 = vmatprep.subr.mxu0 0.0
    %824 = vmatpush1.msra.mxu0 0.0
    %825 = vmatprep.subr.mxu0 0.0
    %826 = vmatpush1.msra.mxu0 0.0
    %827 = vmatprep.subr.mxu0 0.0
    %828 = vmatpush1.msra.mxu0 0.0
    %829 = vmatprep.subr.mxu0 0.0
    %830 = vmatpush1.msra.mxu0 0.0
    %831 = vmatprep.subr.mxu0 0.0
    %832 = vmatpush1.msra.mxu0 0.0
    %833 = vmatprep.subr.mxu0 0.0
    %834 = vmatpush1.msra.mxu0 0.0
    %835 = vmatprep.subr.mxu0 0.0
    %836 = vmatpush1.msra.mxu0 0.0
    %837 = vmatprep.subr.mxu0 0.0
    %838 = vmatpush1.msra.mxu0 0.0
    %839 = vmatprep.subr.mxu0 %v809
    %840 = vmatpush1.msra.mxu0 %v806
    %841 = vmatprep.subr.mxu0 %v793
    %842 = vmatpush1.msra.mxu0 %v792
    %843 = vmatprep.subr.mxu0 0.0
    %844 = vmatpush2.msra.mxu0 0.0
    %845 = vmatprep.subr.mxu0 0.0
    %846 = vmatpush2.msra.mxu0 0.0
    %847 = vmatprep.subr.mxu0 0.0
    %848 = vmatpush2.msra.mxu0 0.0
    %849 = vmatprep.subr.mxu0 0.0
    %850 = vmatpush2.msra.mxu0 0.0
    %851 = vmatprep.subr.mxu0 0.0
    %852 = vmatpush2.msra.mxu0 0.0
    %853 = vmatprep.subr.mxu0 0.0
    %854 = vmatpush2.msra.mxu0 0.0
    %855 = vmatprep.subr.mxu0 0.0
    %856 = vmatpush2.msra.mxu0 0.0
    %857 = vmatprep.subr.mxu0 0.0
    %858 = vmatpush2.msra.mxu0 0.0
    %859 = vmatprep.subr.mxu0 0.0
    %860 = vmatpush2.msra.mxu0 0.0
    %861 = vmatprep.subr.mxu0 0.0
    %862 = vmatpush2.msra.mxu0 0.0
    %863 = vmatprep.subr.mxu0 0.0
    %864 = vmatpush2.msra.mxu0 0.0
    %865 = vmatprep.subr.mxu0 0.0
    %866 = vmatpush2.msra.mxu0 0.0
    %867 = vmatprep.subr.mxu0 0.0
    %868 = vmatpush2.msra.mxu0 0.0
    %869 = vmatprep.subr.mxu0 0.0
    %870 = vmatpush2.msra.mxu0 0.0
    %871 = vmatprep.subr.mxu0 0.0
    %872 = vmatpush2.msra.mxu0 0.0
    %873 = vmatprep.subr.mxu0 0.0
    %874 = vmatpush2.msra.mxu0 0.0
    %875 = vmatprep.mubr.f32.mxu0 0.0
    %876 = vmatmul.mubr.f32.gmra.mxu0 %v800
    %v877 = vpop.f32.mrf.mxu0
    %v878 = vadd.f32 0.0, %v877
    %v879 = vpop.f32.mrf.mxu0
    %v880 = vadd.f32 0.0, %v879
    %881 = vmatprep.mubr.f32.mxu0 0.0
    %882 = vmatmul.mubr.f32.gmra.mxu0 %v803
    %v883 = vpop.f32.mrf.mxu0
    %v884 = vadd.f32 0.0, %v883
    %v885 = vpop.f32.mrf.mxu0
    %v886 = vadd.f32 0.0, %v885
    %887 = vdwg.mxu0
    %v888 = vmax.f32 %v878, %v884
    %v889 = vmax.f32 %v880, %v886
    %v890 = vld [vmem:[%s1 + $0x4c0] sm:$0xff]
    %v891 = vld [vmem:[%s1 + $0x4c8] sm:$0xff]
    %v892 = vld [vmem:[%s1 + $0x4d0] sm:$0xff]
    %v893 = vld [vmem:[%s1 + $0x4d8] sm:$0xff]
    %v894 = vld [vmem:[%s1 + $0x4e0] sm:$0xff]
    %v895 = vld [vmem:[%s1 + $0x4e8] sm:$0xff]
    %v896 = vld [vmem:[%s1 + $0x4f0] sm:$0xff]
    %v897 = vld [vmem:[%s1 + $0x4f8] sm:$0xff]
    %v898 = vld [vmem:[%s1 + $0x500] sm:$0xff]
    %v899 = vld [vmem:[%s1 + $0x508] sm:$0xff]
    %v900 = vld [vmem:[%s1 + $0x510] sm:$0xff]
    %v901 = vld [vmem:[%s1 + $0x518] sm:$0xff]
    %v902 = vld [vmem:[%s1 + $0x520] sm:$0xff]
    %v903 = vld [vmem:[%s1 + $0x528] sm:$0xff]
    %v904 = vld [vmem:[%s1 + $0x530] sm:$0xff]
    %v905 = vld [vmem:[%s1 + $0x538] sm:$0xff]
    %v906 = vld [vmem:[%s1 + $0x540] sm:$0xff]
    %v907 = vld [vmem:[%s1 + $0x548] sm:$0xff]
    %v908 = vld [vmem:[%s1 + $0x550] sm:$0xff]
    %v909 = vld [vmem:[%s1 + $0x558] sm:$0xff]
    %v910 = vld [vmem:[%s1 + $0x560] sm:$0xff]
    %v911 = vld [vmem:[%s1 + $0x568] sm:$0xff]
    %v912 = vld [vmem:[%s1 + $0x570] sm:$0xff]
    %v913 = vld [vmem:[%s1 + $0x578] sm:$0xff]
    %v914 = vld [vmem:[%s1 + $0x580] sm:$0xff]
    %v915 = vld [vmem:[%s1 + $0x588] sm:$0xff]
    %v916 = vld [vmem:[%s1 + $0x590] sm:$0xff]
    %v917 = vld [vmem:[%s1 + $0x598] sm:$0xff]
    %v918 = vld [vmem:[%s1 + $0x5a0] sm:$0xff]
    %v919 = vld [vmem:[%s1 + $0x5a8] sm:$0xff]
    %v920 = vld [vmem:[%s1 + $0x5b0] sm:$0xff]
    %v921 = vld [vmem:[%s1 + $0x5b8] sm:$0xff]
    %v922 = vld [vmem:[%s1 + $0x5c0] sm:$0xff]
    %v923 = vld [vmem:[%s1 + $0x5c8] sm:$0xff]
    %v924 = vld [vmem:[%s1 + $0x5d0] sm:$0xff]
    %v925 = vld [vmem:[%s1 + $0x5d8] sm:$0xff]
    %v926 = vld [vmem:[%s1 + $0x5e0] sm:$0xff]
    %v927 = vld [vmem:[%s1 + $0x5e8] sm:$0xff]
    %v928 = vld [vmem:[%s1 + $0x5f0] sm:$0xff]
    %v929 = vld [vmem:[%s1 + $0x5f8] sm:$0xff]
    %vm930 = vcmask 261120
    %v932 = vsel %vm930, %v889, 0
    %934 = vmatprep.subr.mxu0 %v921
    %935 = vmatpush1.msra.mxu0 %v920
    %936 = vmatprep.subr.mxu0 %v919
    %937 = vmatpush1.msra.mxu0 %v918
    %938 = vmatprep.subr.mxu0 %v917
    %939 = vmatpush1.msra.mxu0 %v916
    %940 = vmatprep.subr.mxu0 %v915
    %941 = vmatpush1.msra.mxu0 %v914
    %942 = vmatprep.subr.mxu0 %v913
    %943 = vmatpush1.msra.mxu0 %v912
    %944 = vmatprep.subr.mxu0 %v911
    %945 = vmatpush1.msra.mxu0 %v910
    %946 = vmatprep.subr.mxu0 %v909
    %947 = vmatpush1.msra.mxu0 %v908
    %948 = vmatprep.subr.mxu0 %v907
    %949 = vmatpush1.msra.mxu0 %v906
    %950 = vmatprep.subr.mxu0 %v905
    %951 = vmatpush1.msra.mxu0 %v904
    %952 = vmatprep.subr.mxu0 %v903
    %953 = vmatpush1.msra.mxu0 %v902
    %954 = vmatprep.subr.mxu0 %v901
    %955 = vmatpush1.msra.mxu0 %v900
    %956 = vmatprep.subr.mxu0 %v899
    %957 = vmatpush1.msra.mxu0 %v898
    %958 = vmatprep.subr.mxu0 %v897
    %959 = vmatpush1.msra.mxu0 %v896
    %960 = vmatprep.subr.mxu0 %v895
    %961 = vmatpush1.msra.mxu0 %v894
    %962 = vmatprep.subr.mxu0 %v893
    %963 = vmatpush1.msra.mxu0 %v892
    %964 = vmatprep.subr.mxu0 %v891
    %965 = vmatpush1.msra.mxu0 %v890
    %966 = vmatprep.subr.mxu0 0.0
    %967 = vmatpush2.msra.mxu0 0.0
    %968 = vmatprep.subr.mxu0 0.0
    %969 = vmatpush2.msra.mxu0 0.0
    %970 = vmatprep.subr.mxu0 0.0
    %971 = vmatpush2.msra.mxu0 0.0
    %972 = vmatprep.subr.mxu0 0.0
    %973 = vmatpush2.msra.mxu0 0.0
    %974 = vmatprep.subr.mxu0 0.0
    %975 = vmatpush2.msra.mxu0 0.0
    %976 = vmatprep.subr.mxu0 0.0
    %977 = vmatpush2.msra.mxu0 0.0
    %978 = vmatprep.subr.mxu0 0.0
    %979 = vmatpush2.msra.mxu0 0.0
    %980 = vmatprep.subr.mxu0 0.0
    %981 = vmatpush2.msra.mxu0 0.0
    %982 = vmatprep.subr.mxu0 0.0
    %983 = vmatpush2.msra.mxu0 0.0
    %984 = vmatprep.subr.mxu0 0.0
    %985 = vmatpush2.msra.mxu0 0.0
    %986 = vmatprep.subr.mxu0 0.0
    %987 = vmatpush2.msra.mxu0 0.0
    %988 = vmatprep.subr.mxu0 0.0
    %989 = vmatpush2.msra.mxu0 0.0
    %990 = vmatprep.subr.mxu0 %v929
    %991 = vmatpush2.msra.mxu0 %v928
    %992 = vmatprep.subr.mxu0 %v927
    %993 = vmatpush2.msra.mxu0 %v926
    %994 = vmatprep.subr.mxu0 %v925
    %995 = vmatpush2.msra.mxu0 %v924
    %996 = vmatprep.subr.mxu0 %v923
    %997 = vmatpush2.msra.mxu0 %v922
    %998 = vmatprep.mubr.f32.mxu0 %v932
    %999 = vmatmul.mubr.f32.gmra.mxu0 %v888
    %v1000 = vpop.f32.mrf.mxu0
    %v1001 = vadd.f32 0.0, %v1000
    %v1002 = vpop.f32.mrf.mxu0
    %v1003 = vadd.f32 0.0, %v1002
    %1004 = vdwg.mxu0
    %v1005 = vmax.f32 %v1001, %v1003
    %vm1006 = vcmask 647168
    %1007 = vst.msk [vmem:[#allocation2 + $0x62] sm:$0x1] %vm1006, %v1005
    %v1009 = vrot.slane %v1005, 1
    %1010 = vrot.lane.b32.xlu0 %v1009, 80
    %v1011 = vpop.permute.xlu0 %1010
    %vm1013 = vcmask 1041024
    %1014 = vst.msk [vmem:[#allocation2 + $0x62] sm:$0x1] %vm1013, %v1011
    %vm1015 = vcmask 253952
    %1016 = vst.msk [vmem:[#allocation2 + $0x6a] sm:$0x1] %vm1015, %v1011
    %v1017 = vrot.slane %v1005, 2
    %1018 = vrot.lane.b32.xlu0 %v1017, 32
    %v1019 = vpop.permute.xlu0 %1018
    %vm1021 = vcmask 909568
    %1022 = vst.msk [vmem:[#allocation2 + $0x6a] sm:$0x1] %vm1021, %v1019
    %v1023 = vrot.slane %v1005, 3
    %1024 = vrot.lane.b32.xlu0 %v1023, 112
    %v1025 = vpop.permute.xlu0 %1024
    %vm1027 = vcmask 1041280
    %1028 = vst.msk [vmem:[#allocation2 + $0x6a] sm:$0x1] %vm1027, %v1025
    %vm1029 = vcmask 516096
    %1030 = vst.msk [vmem:[#allocation2 + $0x72] sm:$0x1] %vm1029, %v1025
    %v1031 = vrot.slane %v1005, 4
    %1032 = vrot.lane.b32.xlu0 %v1031, 64
    %v1033 = vpop.permute.xlu0 %1032
    %vm1035 = vcmask 1040896
    %1036 = vst.msk [vmem:[#allocation2 + $0x72] sm:$0x1] %vm1035, %v1033
    %vm1037 = vcmask 122880
    %1038 = vst.msk [vmem:[#allocation2 + $0x7a] sm:$0x1] %vm1037, %v1033
    %s1039 = scalar_lea.vmem [#allocation2], 98
    %v1040 = vld [vmem:[%s1039] ss:$8 sm:$0xf]
    %v1041 = vld [vmem:[%s2] sm:$0xff]
    %v1042 = vld [vmem:[%s2 + $0x8] sm:$0xff]
    %v1043 = vld [vmem:[%s2 + $0x10] sm:$0xff]
    %v1044 = vld [vmem:[%s2 + $0x18] sm:$0xff]
    %v1045 = vld [vmem:[%s2 + $0x20] sm:$0xff]
    %v1046 = vld [vmem:[%s2 + $0x28] sm:$0xff]
    %v1047 = vld [vmem:[%s2 + $0x30] sm:$0xff]
    %v1048 = vld [vmem:[%s2 + $0x38] sm:$0xff]
    %v1049 = vld [vmem:[%s2 + $0x40] sm:$0xff]
    %v1050 = vld [vmem:[%s2 + $0x48] sm:$0xff]
    %v1051 = vld [vmem:[%s2 + $0x50] sm:$0xff]
    %v1052 = vld [vmem:[%s2 + $0x58] sm:$0xff]
    %v1053 = vld [vmem:[%s2 + $0x60] sm:$0xff]
    %v1054 = vld [vmem:[%s2 + $0x68] sm:$0xff]
    %v1055 = vld [vmem:[%s2 + $0x70] sm:$0xff]
    %v1056 = vld [vmem:[%s2 + $0x78] sm:$0xff]
    %v1057 = vld [vmem:[%s2 + $0x80] sm:$0xff]
    %v1058 = vld [vmem:[%s2 + $0x88] sm:$0xff]
    %v1059 = vld [vmem:[%s2 + $0x90] sm:$0xff]
    %v1060 = vld [vmem:[%s2 + $0x98] sm:$0xff]
    %v1061 = vld [vmem:[%s2 + $0xa0] sm:$0xff]
    %v1062 = vld [vmem:[%s2 + $0xa8] sm:$0xff]
    %v1063 = vld [vmem:[%s2 + $0xb0] sm:$0xff]
    %v1064 = vld [vmem:[%s2 + $0xb8] sm:$0xff]
    %v1065 = vld [vmem:[%s2 + $0xc0] sm:$0xff]
    %v1066 = vld [vmem:[%s2 + $0xc8] sm:$0xff]
    %v1067 = vld [vmem:[%s2 + $0xd0] sm:$0xff]
    %v1068 = vld [vmem:[%s2 + $0xd8] sm:$0xff]
    %v1069 = vld [vmem:[%s2 + $0xe0] sm:$0xff]
    %v1070 = vld [vmem:[%s2 + $0xe8] sm:$0xff]
    %v1071 = vld [vmem:[%s2 + $0xf0] sm:$0xff]
    %v1072 = vld [vmem:[%s2 + $0xf8] sm:$0xff]
    %v1073 = vld [vmem:[%s2 + $0x100] sm:$0xff]
    %v1074 = vld [vmem:[%s2 + $0x108] sm:$0xff]
    %v1075 = vld [vmem:[%s2 + $0x110] sm:$0xff]
    %v1076 = vld [vmem:[%s2 + $0x118] sm:$0xff]
    %v1077 = vld [vmem:[%s2 + $0x120] sm:$0xff]
    %v1078 = vld [vmem:[%s2 + $0x128] sm:$0xff]
    %v1079 = vld [vmem:[%s2 + $0x130] sm:$0xff]
    %v1080 = vld [vmem:[%s2 + $0x138] sm:$0xff]
    %v1081 = vld [vmem:[%s2 + $0x140] sm:$0xff]
    %v1082 = vld [vmem:[%s2 + $0x148] sm:$0xff]
    %v1083 = vld [vmem:[%s2 + $0x150] sm:$0xff]
    %v1084 = vld [vmem:[%s2 + $0x158] sm:$0xff]
    %v1085 = vld [vmem:[%s2 + $0x160] sm:$0xff]
    %v1086 = vld [vmem:[%s2 + $0x168] sm:$0xff]
    %v1087 = vld [vmem:[%s2 + $0x170] sm:$0xff]
    %v1088 = vld [vmem:[%s2 + $0x178] sm:$0xff]
    %v1089 = vld [vmem:[%s2 + $0x180] sm:$0xff]
    %v1090 = vld [vmem:[%s2 + $0x188] sm:$0xff]
    %v1091 = vld [vmem:[%s1 + $0x602] ss:$0 sm:$0xff]
    %v1093 = vlaneseq
    %v1094 = vshrl.u32 %v1093, 7
    %v1095 = vsub.s32 0, %v1094
    %v1096 = vrot.slane %v1040, %v1095
    %v1097 = vlaneseq
    %v1098 = vshrl.u32 %v1097, 7
    %v1099 = vsub.s32 1, %v1098
    %v1100 = vrot.slane %v1040, %v1099
    %v1101 = vlaneseq
    %v1102 = vshrl.u32 %v1101, 7
    %v1103 = vsub.s32 2, %v1102
    %v1104 = vrot.slane %v1040, %v1103
    %v1105 = vlaneseq
    %v1106 = vshrl.u32 %v1105, 7
    %v1107 = vsub.s32 3, %v1106
    %v1108 = vrot.slane %v1040, %v1107
    %vm1112 = vcmask 130048
    %v1113 = vsel %vm1112, %v1108, 0
    %1115 = vmatprep.subr.mxu0 0.0
    %1116 = vmatpush1.msra.mxu0 %v1056
    %1117 = vmatprep.subr.mxu0 0.0
    %1118 = vmatpush1.msra.mxu0 %v1055
    %1119 = vmatprep.subr.mxu0 0.0
    %1120 = vmatpush1.msra.mxu0 %v1054
    %1121 = vmatprep.subr.mxu0 0.0
    %1122 = vmatpush1.msra.mxu0 %v1053
    %1123 = vmatprep.subr.mxu0 0.0
    %1124 = vmatpush1.msra.mxu0 %v1052
    %1125 = vmatprep.subr.mxu0 0.0
    %1126 = vmatpush1.msra.mxu0 %v1051
    %1127 = vmatprep.subr.mxu0 0.0
    %1128 = vmatpush1.msra.mxu0 %v1050
    %1129 = vmatprep.subr.mxu0 0.0
    %1130 = vmatpush1.msra.mxu0 %v1049
    %1131 = vmatprep.subr.mxu0 0.0
    %1132 = vmatpush1.msra.mxu0 %v1048
    %1133 = vmatprep.subr.mxu0 0.0
    %1134 = vmatpush1.msra.mxu0 %v1047
    %1135 = vmatprep.subr.mxu0 0.0
    %1136 = vmatpush1.msra.mxu0 %v1046
    %1137 = vmatprep.subr.mxu0 0.0
    %1138 = vmatpush1.msra.mxu0 %v1045
    %1139 = vmatprep.subr.mxu0 0.0
    %1140 = vmatpush1.msra.mxu0 %v1044
    %1141 = vmatprep.subr.mxu0 0.0
    %1142 = vmatpush1.msra.mxu0 %v1043
    %1143 = vmatprep.subr.mxu0 0.0
    %1144 = vmatpush1.msra.mxu0 %v1042
    %1145 = vmatprep.subr.mxu0 0.0
    %1146 = vmatpush1.msra.mxu0 %v1041
    %1147 = vmatprep.subr.mxu0 0.0
    %1148 = vmatpush2.msra.mxu0 %v1072
    %1149 = vmatprep.subr.mxu0 0.0
    %1150 = vmatpush2.msra.mxu0 %v1071
    %1151 = vmatprep.subr.mxu0 0.0
    %1152 = vmatpush2.msra.mxu0 %v1070
    %1153 = vmatprep.subr.mxu0 0.0
    %1154 = vmatpush2.msra.mxu0 %v1069
    %1155 = vmatprep.subr.mxu0 0.0
    %1156 = vmatpush2.msra.mxu0 %v1068
    %1157 = vmatprep.subr.mxu0 0.0
    %1158 = vmatpush2.msra.mxu0 %v1067
    %1159 = vmatprep.subr.mxu0 0.0
    %1160 = vmatpush2.msra.mxu0 %v1066
    %1161 = vmatprep.subr.mxu0 0.0
    %1162 = vmatpush2.msra.mxu0 %v1065
    %1163 = vmatprep.subr.mxu0 0.0
    %1164 = vmatpush2.msra.mxu0 %v1064
    %1165 = vmatprep.subr.mxu0 0.0
    %1166 = vmatpush2.msra.mxu0 %v1063
    %1167 = vmatprep.subr.mxu0 0.0
    %1168 = vmatpush2.msra.mxu0 %v1062
    %1169 = vmatprep.subr.mxu0 0.0
    %1170 = vmatpush2.msra.mxu0 %v1061
    %1171 = vmatprep.subr.mxu0 0.0
    %1172 = vmatpush2.msra.mxu0 %v1060
    %1173 = vmatprep.subr.mxu0 0.0
    %1174 = vmatpush2.msra.mxu0 %v1059
    %1175 = vmatprep.subr.mxu0 0.0
    %1176 = vmatpush2.msra.mxu0 %v1058
    %1177 = vmatprep.subr.mxu0 0.0
    %1178 = vmatpush2.msra.mxu0 %v1057
    %1179 = vmatprep.mubr.f32.mxu0 %v1100
    %1180 = vmatmul.mubr.f32.gmra.mxu0 %v1096
    %v1181 = vpop.f32.mrf.mxu0
    %v1182 = vadd.f32 %v1091, %v1181
    %v1183 = vpop.f32.mrf.mxu0
    %1184 = vdwg.mxu0
    %1185 = vmatprep.subr.mxu0 0.0
    %1186 = vmatpush1.msra.mxu0 %v1088
    %1187 = vmatprep.subr.mxu0 0.0
    %1188 = vmatpush1.msra.mxu0 %v1087
    %1189 = vmatprep.subr.mxu0 0.0
    %1190 = vmatpush1.msra.mxu0 %v1086
    %1191 = vmatprep.subr.mxu0 0.0
    %1192 = vmatpush1.msra.mxu0 %v1085
    %1193 = vmatprep.subr.mxu0 0.0
    %1194 = vmatpush1.msra.mxu0 %v1084
    %1195 = vmatprep.subr.mxu0 0.0
    %1196 = vmatpush1.msra.mxu0 %v1083
    %1197 = vmatprep.subr.mxu0 0.0
    %1198 = vmatpush1.msra.mxu0 %v1082
    %1199 = vmatprep.subr.mxu0 0.0
    %1200 = vmatpush1.msra.mxu0 %v1081
    %1201 = vmatprep.subr.mxu0 0.0
    %1202 = vmatpush1.msra.mxu0 %v1080
    %1203 = vmatprep.subr.mxu0 0.0
    %1204 = vmatpush1.msra.mxu0 %v1079
    %1205 = vmatprep.subr.mxu0 0.0
    %1206 = vmatpush1.msra.mxu0 %v1078
    %1207 = vmatprep.subr.mxu0 0.0
    %1208 = vmatpush1.msra.mxu0 %v1077
    %1209 = vmatprep.subr.mxu0 0.0
    %1210 = vmatpush1.msra.mxu0 %v1076
    %1211 = vmatprep.subr.mxu0 0.0
    %1212 = vmatpush1.msra.mxu0 %v1075
    %1213 = vmatprep.subr.mxu0 0.0
    %1214 = vmatpush1.msra.mxu0 %v1074
    %1215 = vmatprep.subr.mxu0 0.0
    %1216 = vmatpush1.msra.mxu0 %v1073
    %1217 = vmatprep.subr.mxu0 0.0
    %1218 = vmatpush2.msra.mxu0 0.0
    %1219 = vmatprep.subr.mxu0 0.0
    %1220 = vmatpush2.msra.mxu0 0.0
    %1221 = vmatprep.subr.mxu0 0.0
    %1222 = vmatpush2.msra.mxu0 0.0
    %1223 = vmatprep.subr.mxu0 0.0
    %1224 = vmatpush2.msra.mxu0 0.0
    %1225 = vmatprep.subr.mxu0 0.0
    %1226 = vmatpush2.msra.mxu0 0.0
    %1227 = vmatprep.subr.mxu0 0.0
    %1228 = vmatpush2.msra.mxu0 0.0
    %1229 = vmatprep.subr.mxu0 0.0
    %1230 = vmatpush2.msra.mxu0 0.0
    %1231 = vmatprep.subr.mxu0 0.0
    %1232 = vmatpush2.msra.mxu0 0.0
    %1233 = vmatprep.subr.mxu0 0.0
    %1234 = vmatpush2.msra.mxu0 0.0
    %1235 = vmatprep.subr.mxu0 0.0
    %1236 = vmatpush2.msra.mxu0 0.0
    %1237 = vmatprep.subr.mxu0 0.0
    %1238 = vmatpush2.msra.mxu0 0.0
    %1239 = vmatprep.subr.mxu0 0.0
    %1240 = vmatpush2.msra.mxu0 0.0
    %1241 = vmatprep.subr.mxu0 0.0
    %1242 = vmatpush2.msra.mxu0 0.0
    %1243 = vmatprep.subr.mxu0 0.0
    %1244 = vmatpush2.msra.mxu0 0.0
    %1245 = vmatprep.subr.mxu0 0.0
    %1246 = vmatpush2.msra.mxu0 %v1090
    %1247 = vmatprep.subr.mxu0 0.0
    %1248 = vmatpush2.msra.mxu0 %v1089
    %1249 = vmatprep.mubr.f32.mxu0 %v1113
    %1250 = vmatmul.mubr.f32.gmra.mxu0 %v1104
    %v1251 = vpop.f32.mrf.mxu0
    %v1252 = vadd.f32 %v1182, %v1251
    %v1253 = vpop.f32.mrf.mxu0
    %1254 = vdwg.mxu0
    %v1255 = vmax.f32 %v1252, 0.0
    %v1256 = vld [vmem:[%s2 + $0x190] sm:$0xff]
    %v1257 = vld [vmem:[%s2 + $0x198] sm:$0xff]
    %v1258 = vld [vmem:[%s2 + $0x1a0] sm:$0xff]
    %v1259 = vld [vmem:[%s2 + $0x1a8] sm:$0xff]
    %v1260 = vld [vmem:[%s2 + $0x1b0] sm:$0xff]
    %v1261 = vld [vmem:[%s2 + $0x1b8] sm:$0xff]
    %v1262 = vld [vmem:[%s2 + $0x1c0] sm:$0xff]
    %v1263 = vld [vmem:[%s2 + $0x1c8] sm:$0xff]
    %v1264 = vld [vmem:[%s2 + $0x1d0] sm:$0xff]
    %v1265 = vld [vmem:[%s2 + $0x1d8] sm:$0xff]
    %v1266 = vld [vmem:[%s2 + $0x1e0] sm:$0xff]
    %v1267 = vld [vmem:[%s2 + $0x1e8] sm:$0xff]
    %v1268 = vld [vmem:[%s2 + $0x1f0] sm:$0xff]
    %v1269 = vld [vmem:[%s2 + $0x1f8] sm:$0xff]
    %v1270 = vld [vmem:[%s2 + $0x200] sm:$0xff]
    %v1271 = vld [vmem:[%s1 + $0x603] ss:$0 sm:$0xff]
    %vm1272 = vcmask 982016
    %v1274 = vsel %vm1272, %v1255, 0
    %1276 = vmatprep.subr.mxu0 0.0
    %1277 = vmatpush1.msra.mxu0 0.0
    %1278 = vmatprep.subr.mxu0 0.0
    %1279 = vmatpush1.msra.mxu0 %v1270
    %1280 = vmatprep.subr.mxu0 0.0
    %1281 = vmatpush1.msra.mxu0 %v1269
    %1282 = vmatprep.subr.mxu0 0.0
    %1283 = vmatpush1.msra.mxu0 %v1268
    %1284 = vmatprep.subr.mxu0 0.0
    %1285 = vmatpush1.msra.mxu0 %v1267
    %1286 = vmatprep.subr.mxu0 0.0
    %1287 = vmatpush1.msra.mxu0 %v1266
    %1288 = vmatprep.subr.mxu0 0.0
    %1289 = vmatpush1.msra.mxu0 %v1265
    %1290 = vmatprep.subr.mxu0 0.0
    %1291 = vmatpush1.msra.mxu0 %v1264
    %1292 = vmatprep.subr.mxu0 0.0
    %1293 = vmatpush1.msra.mxu0 %v1263
    %1294 = vmatprep.subr.mxu0 0.0
    %1295 = vmatpush1.msra.mxu0 %v1262
    %1296 = vmatprep.subr.mxu0 0.0
    %1297 = vmatpush1.msra.mxu0 %v1261
    %1298 = vmatprep.subr.mxu0 0.0
    %1299 = vmatpush1.msra.mxu0 %v1260
    %1300 = vmatprep.subr.mxu0 0.0
    %1301 = vmatpush1.msra.mxu0 %v1259
    %1302 = vmatprep.subr.mxu0 0.0
    %1303 = vmatpush1.msra.mxu0 %v1258
    %1304 = vmatprep.subr.mxu0 0.0
    %1305 = vmatpush1.msra.mxu0 %v1257
    %1306 = vmatprep.subr.mxu0 0.0
    %1307 = vmatpush1.msra.mxu0 %v1256
    %1308 = vmatprep.subr.mxu0 0.0
    %1309 = vmatpush2.msra.mxu0 0.0
    %1310 = vmatprep.subr.mxu0 0.0
    %1311 = vmatpush2.msra.mxu0 0.0
    %1312 = vmatprep.subr.mxu0 0.0
    %1313 = vmatpush2.msra.mxu0 0.0
    %1314 = vmatprep.subr.mxu0 0.0
    %1315 = vmatpush2.msra.mxu0 0.0
    %1316 = vmatprep.subr.mxu0 0.0
    %1317 = vmatpush2.msra.mxu0 0.0
    %1318 = vmatprep.subr.mxu0 0.0
    %1319 = vmatpush2.msra.mxu0 0.0
    %1320 = vmatprep.subr.mxu0 0.0
    %1321 = vmatpush2.msra.mxu0 0.0
    %1322 = vmatprep.subr.mxu0 0.0
    %1323 = vmatpush2.msra.mxu0 0.0
    %1324 = vmatprep.subr.mxu0 0.0
    %1325 = vmatpush2.msra.mxu0 0.0
    %1326 = vmatprep.subr.mxu0 0.0
    %1327 = vmatpush2.msra.mxu0 0.0
    %1328 = vmatprep.subr.mxu0 0.0
    %1329 = vmatpush2.msra.mxu0 0.0
    %1330 = vmatprep.subr.mxu0 0.0
    %1331 = vmatpush2.msra.mxu0 0.0
    %1332 = vmatprep.subr.mxu0 0.0
    %1333 = vmatpush2.msra.mxu0 0.0
    %1334 = vmatprep.subr.mxu0 0.0
    %1335 = vmatpush2.msra.mxu0 0.0
    %1336 = vmatprep.subr.mxu0 0.0
    %1337 = vmatpush2.msra.mxu0 0.0
    %1338 = vmatprep.subr.mxu0 0.0
    %1339 = vmatpush2.msra.mxu0 0.0
    %1340 = vmatprep.mubr.f32.mxu0 0.0
    %1341 = vmatmul.mubr.f32.gmra.mxu0 %v1274
    %v1342 = vpop.f32.mrf.mxu0
    %v1343 = vadd.f32 %v1271, %v1342
    %v1344 = vpop.f32.mrf.mxu0
    %1345 = vdwg.mxu0
    %v1346 = vmax.f32 %v1343, 0.0
    %v1347 = vld [vmem:[%s2 + $0x208] sm:$0xff]
    %v1348 = vld [vmem:[%s2 + $0x210] sm:$0xff]
    %v1349 = vld [vmem:[%s2 + $0x218] sm:$0xff]
    %v1350 = vld [vmem:[%s2 + $0x220] sm:$0xff]
    %v1351 = vld [vmem:[%s2 + $0x228] sm:$0xff]
    %v1352 = vld [vmem:[%s2 + $0x230] sm:$0xff]
    %v1353 = vld [vmem:[%s2 + $0x238] sm:$0xff]
    %v1354 = vld [vmem:[%s2 + $0x240] sm:$0xff]
    %v1355 = vld [vmem:[%s2 + $0x248] sm:$0xff]
    %v1356 = vld [vmem:[%s2 + $0x250] sm:$0xff]
    %v1357 = vld [vmem:[%s2 + $0x258] sm:$0xf]
    %v1358 = vld [vmem:[%s1 + $0x604] ss:$0 sm:$0xff]
    %v1360 = vsel %vm116, %v1346, 0
    %v1363 = vsel %vm129, %v1357, 0
    %1365 = vmatprep.subr.mxu0 0.0
    %1366 = vmatpush1.msra.mxu0 0.0
    %1367 = vmatprep.subr.mxu0 0.0
    %1368 = vmatpush1.msra.mxu0 0.0
    %1369 = vmatprep.subr.mxu0 0.0
    %1370 = vmatpush1.msra.mxu0 0.0
    %1371 = vmatprep.subr.mxu0 0.0
    %1372 = vmatpush1.msra.mxu0 0.0
    %1373 = vmatprep.subr.mxu0 0.0
    %1374 = vmatpush1.msra.mxu0 0.0
    %1375 = vmatprep.subr.mxu0 0.0
    %1376 = vmatpush1.msra.mxu0 %v1363
    %1377 = vmatprep.subr.mxu0 0.0
    %1378 = vmatpush1.msra.mxu0 %v1356
    %1379 = vmatprep.subr.mxu0 0.0
    %1380 = vmatpush1.msra.mxu0 %v1355
    %1381 = vmatprep.subr.mxu0 0.0
    %1382 = vmatpush1.msra.mxu0 %v1354
    %1383 = vmatprep.subr.mxu0 0.0
    %1384 = vmatpush1.msra.mxu0 %v1353
    %1385 = vmatprep.subr.mxu0 0.0
    %1386 = vmatpush1.msra.mxu0 %v1352
    %1387 = vmatprep.subr.mxu0 0.0
    %1388 = vmatpush1.msra.mxu0 %v1351
    %1389 = vmatprep.subr.mxu0 0.0
    %1390 = vmatpush1.msra.mxu0 %v1350
    %1391 = vmatprep.subr.mxu0 0.0
    %1392 = vmatpush1.msra.mxu0 %v1349
    %1393 = vmatprep.subr.mxu0 0.0
    %1394 = vmatpush1.msra.mxu0 %v1348
    %1395 = vmatprep.subr.mxu0 0.0
    %1396 = vmatpush1.msra.mxu0 %v1347
    %1397 = vmatprep.subr.mxu0 0.0
    %1398 = vmatpush2.msra.mxu0 0.0
    %1399 = vmatprep.subr.mxu0 0.0
    %1400 = vmatpush2.msra.mxu0 0.0
    %1401 = vmatprep.subr.mxu0 0.0
    %1402 = vmatpush2.msra.mxu0 0.0
    %1403 = vmatprep.subr.mxu0 0.0
    %1404 = vmatpush2.msra.mxu0 0.0
    %1405 = vmatprep.subr.mxu0 0.0
    %1406 = vmatpush2.msra.mxu0 0.0
    %1407 = vmatprep.subr.mxu0 0.0
    %1408 = vmatpush2.msra.mxu0 0.0
    %1409 = vmatprep.subr.mxu0 0.0
    %1410 = vmatpush2.msra.mxu0 0.0
    %1411 = vmatprep.subr.mxu0 0.0
    %1412 = vmatpush2.msra.mxu0 0.0
    %1413 = vmatprep.subr.mxu0 0.0
    %1414 = vmatpush2.msra.mxu0 0.0
    %1415 = vmatprep.subr.mxu0 0.0
    %1416 = vmatpush2.msra.mxu0 0.0
    %1417 = vmatprep.subr.mxu0 0.0
    %1418 = vmatpush2.msra.mxu0 0.0
    %1419 = vmatprep.subr.mxu0 0.0
    %1420 = vmatpush2.msra.mxu0 0.0
    %1421 = vmatprep.subr.mxu0 0.0
    %1422 = vmatpush2.msra.mxu0 0.0
    %1423 = vmatprep.subr.mxu0 0.0
    %1424 = vmatpush2.msra.mxu0 0.0
    %1425 = vmatprep.subr.mxu0 0.0
    %1426 = vmatpush2.msra.mxu0 0.0
    %1427 = vmatprep.subr.mxu0 0.0
    %1428 = vmatpush2.msra.mxu0 0.0
    %1429 = vmatprep.mubr.f32.mxu0 0.0
    %1430 = vmatmul.mubr.f32.gmra.mxu0 %v1360
    %v1431 = vpop.f32.mrf.mxu0
    %v1432 = vadd.f32 %v1358, %v1431
    %v1433 = vpop.f32.mrf.mxu0
    %1434 = vdwg.mxu0
    %vm1435 = vcmask 73728
    %1436 = vst.msk [vmem:[#allocation3] sm:$0x1] %vm1435, %v1432
    // Predicated region
    $region14: #{net_forward.1} parent=1 // pred_check
      _
    $region15: #{net_forward.1} parent=1 // pred_check_branch
      %1438 = sbr.rel (0) target = $region17
    $region16: #{net_forward.1} parent=1 // pred_region
      %s1440 = ssub.s32 16, 16
      %1441 = vsyncadd [#allocation4], %s1440
      %s1443 = sshll.u32 [#allocation3], 4
      %s1444 = int_to_ptr.vmem [resolvable:$true] %s1443
      %1446 = dma.vmem_to_hbm [thread:$0]  %s1444, 16, %s3, [#allocation4]
    $region17: #{net_forward.1} parent=1 // pred_fallthru
      _
    // Predicated region
    $region18: #{net_forward.1} parent=1 // pred_check
      _
    $region19: #{net_forward.1} parent=1 // pred_check_branch
      %1448 = sbr.rel (0) target = $region21
    $region20: #{net_forward.1} parent=1 // pred_region
      %1449 = dma.done [#allocation4], 16
    $region21: #{net_forward.1} parent=1 // pred_fallthru
      _
    %1450 = vsyncpa [#allocation4], 1

</llo_original>
